<compile_context>
chip_gen: v5e
topology: v5e:2x2
jax: 0.10.0
libtpu: 0.0.40
codegen_flags: <defaults>
</compile_context>

<pallas_src>
import functools

import jax
import jax.numpy as jnp
from jax import lax
from jax.experimental import pallas as pl
from jax.experimental.pallas import tpu as pltpu


# --------------------------------------------------------------------------
# VMEM-aware planning
# --------------------------------------------------------------------------
def _tpu_vmem_capacity_bytes():
    """Physical per-core VMEM; conservative fallback if the query fails."""
    try:
        return int(pltpu.get_tpu_info().vmem_capacity_bytes)
    except Exception:
        return 64 * 1024 * 1024  # assume the smallest (v7x per-TC) VMEM


def _vmem_estimate(qlen, d_model, n_head, d_head, q_tile, kv_tile):
    """Rough VMEM bytes for one grid step (pipeline buffers + scratch + temps)."""
    f32, bf16 = 4, 2
    hd = n_head * d_head
    h_block = qlen * d_model * f32 * 2                   # double-buffered input
    o_block = q_tile * d_model * f32 * 2                 # double-buffered output
    weights = 4 * d_model * hd * bf16 * 2                # wq/wk/wv/wo (dbl-buffered)
    ln = 2 * d_model * f32 * 2
    kv_cache = 2 * n_head * qlen * d_head * bf16         # K^T / V scratch caches
    scores = n_head * q_tile * kv_tile * f32 * 3         # s, p, slack
    interm = (qlen * hd * f32 * 2                        # K/V projection temps
              + q_tile * hd * f32 * 3                    # q / attn_vec / attn_out
              + n_head * q_tile * d_head * f32 * 3       # q3 / acc / o
              + q_tile * d_model * f32 * 3)              # residual + layernorm
    return h_block + o_block + weights + ln + kv_cache + scores + interm


def _plan(qlen, d_model, n_head, d_head):
    """Pick (q_tile, kv_tile, vmem_limit_bytes) for the current TPU generation."""
    cap = _tpu_vmem_capacity_bytes()
    budget = max(cap - 16 * 1024 * 1024, 32 * 1024 * 1024)   # headroom for Mosaic

    q_cands = [t for t in (512, 256, 128, 64, 32, 16, 8)
               if t <= qlen and qlen % t == 0]
    if qlen <= 512 and qlen not in q_cands:
        q_cands = [qlen] + q_cands
    if not q_cands:
        q_cands = [qlen]

    if qlen <= 1024:
        kv_cands = [qlen]
    else:
        kv_cands = [t for t in (1024, 512, 256, 128) if qlen % t == 0] or [qlen]

    chosen = None
    for qt in q_cands:                                    # largest tiles first
        for kt in kv_cands:
            if 2 * _vmem_estimate(qlen, d_model, n_head, d_head, qt, kt) <= budget:
                chosen = (qt, kt)
                break
        if chosen is not None:
            break
    if chosen is None:
        chosen = (q_cands[-1], kv_cands[-1])

    qt, kt = chosen
    est = 2 * _vmem_estimate(qlen, d_model, n_head, d_head, qt, kt)
    vmem_limit = int(min(max(est, 32 * 1024 * 1024), budget))
    return qt, kt, vmem_limit


# --------------------------------------------------------------------------
# Kernel
# --------------------------------------------------------------------------
def _mha_kernel(h_ref, wq_ref, wk_ref, wv_ref, wo_ref, g_ref, b_ref, out_ref,
                k_scr, v_scr, *, n_head, d_head, q_tile, kv_tile, ln_eps):
    qi = pl.program_id(1)
    hd = n_head * d_head
    seq = h_ref.shape[1]

    # ---- K/V projection once per batch element (q-tile 0), cached in VMEM. --
    # K is written pre-transposed [H, D, S] (review item: QK^T in canonical MXU
    # orientation, S lane-dense); V is written [H, S, D] (canonical for P@V).
    @pl.when(qi == 0)
    def _():
        c = h_ref[0]                                               # [S, dm] f32
        c_t = jnp.transpose(c).astype(jnp.bfloat16)                # [dm, S] bf16
        k_t = jnp.dot(wk_ref[...], c_t,
                      preferred_element_type=jnp.float32)          # [H*D, S]
        k_scr[...] = k_t.reshape(n_head, d_head, seq).astype(k_scr.dtype)
        v = jnp.dot(c.astype(jnp.bfloat16), wv_ref[...],
                    preferred_element_type=jnp.float32)            # [S, H*D]
        v_scr[...] = jnp.transpose(v.reshape(seq, n_head, d_head),
                                   (1, 0, 2)).astype(v_scr.dtype)  # [H, S, D]

    # ---- Q projection for this tile (1/sqrt(d_head) folded into Wq). --------
    start = pl.multiple_of(qi * q_tile, q_tile)
    h_q = h_ref[0, pl.ds(start, q_tile), :]                        # [TQ, dm] f32
    q = jnp.dot(h_q.astype(jnp.bfloat16), wq_ref[...],
                preferred_element_type=jnp.float32)                # [TQ, H*D]
    q3 = jnp.transpose(q.reshape(q_tile, n_head, d_head),
                       (1, 0, 2)).astype(jnp.bfloat16)             # [H, TQ, D]

    # ---- Flash-style online softmax over KV chunks (bounded score tile). ----
    n_kv = seq // kv_tile
    m_i = jnp.full((n_head, q_tile, 1), -jnp.inf, jnp.float32)
    l_i = jnp.zeros((n_head, q_tile, 1), jnp.float32)
    acc = jnp.zeros((n_head, q_tile, d_head), jnp.float32)
    for c_idx in range(n_kv):                                      # static unroll
        lo, hi = c_idx * kv_tile, (c_idx + 1) * kv_tile
        k_c = k_scr[:, :, lo:hi]                                   # [H, D, TK]
        v_c = v_scr[:, lo:hi, :]                                   # [H, TK, D]
        s = jnp.einsum('hqd,hdk->hqk', q3, k_c,
                       preferred_element_type=jnp.float32)         # [H, TQ, TK]
        m_new = jnp.maximum(m_i, jnp.max(s, axis=-1, keepdims=True))
        alpha = jnp.exp(m_i - m_new)
        # NOTE: exp kept in f32 for a single v5e/v6e/v7x code path; bf16 exp is
        # a further EUP win on v6e/v7x only.
        p = jnp.exp(s - m_new)
        l_i = alpha * l_i + jnp.sum(p, axis=-1, keepdims=True)
        acc = alpha * acc + jnp.einsum('hqk,hkd->hqd', p.astype(jnp.bfloat16),
                                       v_c, preferred_element_type=jnp.float32)
        m_i = m_new
    # TODO(synk): dropatt (attention dropout) omitted — eval-mode identity.

    # Deferred softmax normalization on the small [H, TQ, D] tensor (EUP slot).
    o = acc * pl.reciprocal(l_i, approx=True)

    # Fold heads back to [TQ, H*D] with one transpose+reshape, then one wide-K
    # output projection.
    attn_vec = jnp.transpose(o, (1, 0, 2)).reshape(q_tile, hd).astype(jnp.bfloat16)
    attn_out = jnp.dot(attn_vec, wo_ref[...],
                       preferred_element_type=jnp.float32)         # [TQ, dm]
    # TODO(synk): output dropout omitted — eval-mode identity.

    # post-LN: LayerNorm(h + attn_out) over the model dim (f32 residual path).
    x = h_q + attn_out
    mu = jnp.mean(x, axis=-1, keepdims=True)
    var = jnp.mean((x - mu) * (x - mu), axis=-1, keepdims=True)
    y = (x - mu) * lax.rsqrt(var + ln_eps)
    out_ref[0] = (y * g_ref[...] + b_ref[...]).astype(out_ref.dtype)


# --------------------------------------------------------------------------
# Host wrapper
# --------------------------------------------------------------------------
def multi_head_attn(h, wq, wkv, wo, ln_g, ln_b, *, n_head, d_head, ln_eps=1e-5):
    """h: [qlen, bsz, d_model] -> [qlen, bsz, d_model] (eval, no mask / mems)."""
    qlen, bsz, d_model = h.shape
    hd = n_head * d_head
    scale = 1.0 / (d_head ** 0.5)

    # Pre-arrange nn.Linear weights on the host, cast to bf16 for the MXU, and
    # fold the 1/sqrt(d_head) score scale into Wq once.
    wq_t = (jnp.transpose(wq) * scale).astype(jnp.bfloat16)     # [dm, H*D]
    wk = wkv[:hd, :].astype(jnp.bfloat16)                       # [H*D, dm] (for K^T)
    wv_t = jnp.transpose(wkv[hd:, :]).astype(jnp.bfloat16)      # [dm, H*D]
    wo_t = jnp.transpose(wo).astype(jnp.bfloat16)               # [H*D, dm]

    # TODO(synk): a batch-first activation layout upstream would remove these
    # two full HBM transpose passes over h / out.
    hb = jnp.transpose(h, (1, 0, 2))                            # [B, S, dm] f32
    g2 = ln_g.reshape(1, d_model)
    b2 = ln_b.reshape(1, d_model)

    q_tile, kv_tile, vmem_limit = _plan(qlen, d_model, n_head, d_head)
    n_qt = qlen // q_tile

    kernel = functools.partial(_mha_kernel, n_head=n_head, d_head=d_head,
                               q_tile=q_tile, kv_tile=kv_tile, ln_eps=ln_eps)

    # Advisory cost for XLA scheduling around the custom call.
    flops = 8 * qlen * bsz * d_model * hd + 4 * bsz * n_head * qlen * qlen * d_head
    transc = bsz * n_head * qlen * qlen
    bytes_acc = 2 * qlen * bsz * d_model * 4 + 4 * d_model * hd * 2

    out_b = pl.pallas_call(
        kernel,
        out_shape=jax.ShapeDtypeStruct((bsz, qlen, d_model), h.dtype),
        grid=(bsz, n_qt),
        in_specs=[
            # Full sequence for this batch element (block index constant in qi,
            # so it is not re-DMA'd across q tiles).
            pl.BlockSpec((1, qlen, d_model), lambda b, qi: (b, 0, 0)),
            # TODO(synk): pipeline_mode=pl.Buffered(1) on these constant-index
            # weight blocks would halve their VMEM residency once verified.
            pl.BlockSpec(wq_t.shape, lambda b, qi: (0, 0)),      # Wq^T * scale (bf16)
            pl.BlockSpec(wk.shape, lambda b, qi: (0, 0)),        # Wk (bf16)
            pl.BlockSpec(wv_t.shape, lambda b, qi: (0, 0)),      # Wv^T (bf16)
            pl.BlockSpec(wo_t.shape, lambda b, qi: (0, 0)),      # Wo^T (bf16)
            pl.BlockSpec((1, d_model), lambda b, qi: (0, 0)),    # LN gamma
            pl.BlockSpec((1, d_model), lambda b, qi: (0, 0)),    # LN beta
        ],
        out_specs=pl.BlockSpec((1, q_tile, d_model), lambda b, qi: (b, qi, 0)),
        scratch_shapes=[
            pltpu.VMEM((n_head, d_head, qlen), jnp.bfloat16),    # cached K^T
            pltpu.VMEM((n_head, qlen, d_head), jnp.bfloat16),    # cached V
        ],
        compiler_params=pltpu.CompilerParams(
            # batch axis parallel (megacore split); q-tile axis arbitrary so the
            # K/V scratch cache carries across tiles of the same batch element.
            # TODO(synk): for bsz<2 on v7x, a head-split leading grid axis would
            # keep the second TensorCore busy.
            dimension_semantics=("parallel", "arbitrary"),
            vmem_limit_bytes=vmem_limit,
        ),
        cost_estimate=pl.CostEstimate(flops=flops, transcendentals=transc,
                                      bytes_accessed=bytes_acc),
    )(hb, wq_t, wk, wv_t, wo_t, g2, b2)

    return jnp.transpose(out_b, (1, 0, 2))                      # back to [S, B, dm]


# --------------------------------------------------------------------------
# Pure-JAX reference (mirrors the PyTorch forward: eval, no mask / mems)
# --------------------------------------------------------------------------
def _reference(h, wq, wkv, wo, ln_g, ln_b, *, n_head, d_head, ln_eps=1e-5):
    qlen, bsz, d_model = h.shape
    scale = 1.0 / (d_head ** 0.5)
    q = jnp.einsum('ibm,hm->ibh', h, wq).reshape(qlen, bsz, n_head, d_head)
    kvf = jnp.einsum('ibm,hm->ibh', h, wkv)
    k = kvf[..., :n_head * d_head].reshape(qlen, bsz, n_head, d_head)
    v = kvf[..., n_head * d_head:].reshape(qlen, bsz, n_head, d_head)
    score = jnp.einsum('ibnd,jbnd->ijbn', q, k) * scale
    prob = jax.nn.softmax(score, axis=1)
    vec = jnp.einsum('ijbn,jbnd->ibnd', prob, v).reshape(qlen, bsz,
                                                         n_head * d_head)
    attn_out = jnp.einsum('ibh,mh->ibm', vec, wo)
    x = h + attn_out
    mu = jnp.mean(x, axis=-1, keepdims=True)
    var = jnp.mean((x - mu) ** 2, axis=-1, keepdims=True)
    return (x - mu) / jnp.sqrt(var + ln_eps) * ln_g + ln_b


if __name__ == "__main__":
    # Small shapes consistent with the module: seq=8, batch=2, d_model=32,
    # n_head=4, d_head=8.
    qlen, bsz, d_model = 8, 2, 32
    n_head, d_head = 4, 8

    key = jax.random.PRNGKey(0)
    k_h, k_q, k_kv, k_o = jax.random.split(key, 4)

    h = jax.random.normal(k_h, (qlen, bsz, d_model), dtype=jnp.float32)
    # nn.Linear(in, out) stores weight as [out, in]; bias=False.
    wq = 0.02 * jax.random.normal(k_q, (n_head * d_head, d_model), jnp.float32)
    wkv = 0.02 * jax.random.normal(k_kv, (2 * n_head * d_head, d_model),
                                   jnp.float32)
    wo = 0.02 * jax.random.normal(k_o, (d_model, n_head * d_head), jnp.float32)
    ln_g = jnp.ones((d_model,), jnp.float32)      # LayerNorm default init
    ln_b = jnp.zeros((d_model,), jnp.float32)

    out = multi_head_attn(h, wq, wkv, wo, ln_g, ln_b,
                          n_head=n_head, d_head=d_head)
    out = jax.block_until_ready(out)

    ref = _reference(h, wq, wkv, wo, ln_g, ln_b, n_head=n_head, d_head=d_head)
    assert out.shape == (qlen, bsz, d_model)
    # bf16 MXU inputs + approx reciprocal -> slightly looser tolerance.
    assert jnp.allclose(out, ref, atol=2e-2, rtol=2e-2), "mismatch vs reference"

    print("KERNEL_OK")
</pallas_src>

<mosaic_0001>
module attributes {stable_mosaic.version = 11 : i64} {
  func.func @_mha_kernel(%arg0: i32, %arg1: i32, %arg2: memref<1x8x32xf32, #tpu.memory_space<vmem>>, %arg3: memref<32x32xbf16, #tpu.memory_space<vmem>>, %arg4: memref<32x32xbf16, #tpu.memory_space<vmem>>, %arg5: memref<32x32xbf16, #tpu.memory_space<vmem>>, %arg6: memref<32x32xbf16, #tpu.memory_space<vmem>>, %arg7: memref<1x32xf32, #tpu.memory_space<vmem>>, %arg8: memref<1x32xf32, #tpu.memory_space<vmem>>, %arg9: memref<1x8x32xf32, #tpu.memory_space<vmem>>, %arg10: memref<4x8x8xbf16, #tpu.memory_space<vmem>>, %arg11: memref<4x8x8xbf16, #tpu.memory_space<vmem>>) attributes {dimension_semantics = [#tpu.dimension_semantics<parallel>, #tpu.dimension_semantics<arbitrary>], iteration_bounds = array<i64: 2, 1>, scalar_prefetch = 0 : i64, scratch_operands = 2 : i64, tpu.core_type = #tpu.core_type<tc>, window_params = [{transform_indices = @transform_0, window_bounds = array<i64: 1, 8, 32>}, {pipeline_mode = #tpu.pipeline_mode<synchronous>, transform_indices = @transform_1, window_bounds = array<i64: 32, 32>}, {pipeline_mode = #tpu.pipeline_mode<synchronous>, transform_indices = @transform_2, window_bounds = array<i64: 32, 32>}, {pipeline_mode = #tpu.pipeline_mode<synchronous>, transform_indices = @transform_3, window_bounds = array<i64: 32, 32>}, {pipeline_mode = #tpu.pipeline_mode<synchronous>, transform_indices = @transform_4, window_bounds = array<i64: 32, 32>}, {pipeline_mode = #tpu.pipeline_mode<synchronous>, transform_indices = @transform_5, window_bounds = array<i64: 1, 32>}, {pipeline_mode = #tpu.pipeline_mode<synchronous>, transform_indices = @transform_6, window_bounds = array<i64: 1, 32>}, {transform_indices = @transform_7, window_bounds = array<i64: 1, 8, 32>}]} {
    %c0_i32 = arith.constant 0 : i32
    %0 = arith.cmpi eq, %arg1, %c0_i32 : i32
    %1 = arith.extui %0 : i1 to i32
    %c0_i32_0 = arith.constant 0 : i32
    %2 = arith.cmpi ne, %1, %c0_i32_0 : i32
    scf.if %2 {
      %c0_32 = arith.constant 0 : index
      %c0_33 = arith.constant 0 : index
      %c0_34 = arith.constant 0 : index
      %75 = vector.load %arg2[%c0_32, %c0_33, %c0_34] : memref<1x8x32xf32, #tpu.memory_space<vmem>>, vector<1x8x32xf32>
      %76 = vector.shape_cast %75 : vector<1x8x32xf32> to vector<8x32xf32>
      %77 = tpu.transpose %76, [1, 0] : vector<8x32xf32> -> vector<32x8xf32>
      %78 = arith.truncf %77 : vector<32x8xf32> to vector<32x8xbf16>
      %c0_35 = arith.constant 0 : index
      %c0_36 = arith.constant 0 : index
      %79 = vector.load %arg4[%c0_35, %c0_36] : memref<32x32xbf16, #tpu.memory_space<vmem>>, vector<32x32xbf16>
      %cst_37 = arith.constant dense<0.000000e+00> : vector<32x8xf32>
      %80 = tpu.matmul %79, %78, %cst_37 {dimension_numbers = #tpu.dot_dimension_numbers<[1], [0], [0], [1], [0, 0, 1, 1], [], []>} : vector<32x32xbf16>, vector<32x8xbf16>, vector<32x8xf32> -> vector<32x8xf32>
      %81 = vector.shape_cast %80 : vector<32x8xf32> to vector<4x8x8xf32>
      %82 = arith.truncf %81 : vector<4x8x8xf32> to vector<4x8x8xbf16>
      %c0_38 = arith.constant 0 : index
      %c0_39 = arith.constant 0 : index
      %c0_40 = arith.constant 0 : index
      %83 = vector.load %arg10[%c0_38, %c0_39, %c0_40] : memref<4x8x8xbf16, #tpu.memory_space<vmem>>, vector<4x8x8xbf16>
      tpu.vector_store %arg10[%c0_38, %c0_39, %c0_40], %82 {strides = array<i32>} : memref<4x8x8xbf16, #tpu.memory_space<vmem>>, vector<4x8x8xbf16>,
      %84 = arith.truncf %76 : vector<8x32xf32> to vector<8x32xbf16>
      %c0_41 = arith.constant 0 : index
      %c0_42 = arith.constant 0 : index
      %85 = vector.load %arg5[%c0_41, %c0_42] : memref<32x32xbf16, #tpu.memory_space<vmem>>, vector<32x32xbf16>
      %cst_43 = arith.constant dense<0.000000e+00> : vector<8x32xf32>
      %86 = tpu.matmul %84, %85, %cst_43 {dimension_numbers = #tpu.dot_dimension_numbers<[1], [0], [0], [1], [0, 0, 1, 1], [], []>} : vector<8x32xbf16>, vector<32x32xbf16>, vector<8x32xf32> -> vector<8x32xf32>
      %87 = vector.shape_cast %86 : vector<8x32xf32> to vector<8x4x8xf32>
      %88 = tpu.transpose %87, [1, 0, 2] : vector<8x4x8xf32> -> vector<4x8x8xf32>
      %89 = arith.truncf %88 : vector<4x8x8xf32> to vector<4x8x8xbf16>
      %c0_44 = arith.constant 0 : index
      %c0_45 = arith.constant 0 : index
      %c0_46 = arith.constant 0 : index
      %90 = vector.load %arg11[%c0_44, %c0_45, %c0_46] : memref<4x8x8xbf16, #tpu.memory_space<vmem>>, vector<4x8x8xbf16>
      tpu.vector_store %arg11[%c0_44, %c0_45, %c0_46], %89 {strides = array<i32>} : memref<4x8x8xbf16, #tpu.memory_space<vmem>>, vector<4x8x8xbf16>,
    } else {
    }
    %c8_i32 = arith.constant 8 : i32
    %3 = arith.muli %arg1, %c8_i32 : i32
    %4 = tpu.assume_multiple %3, 8 : i32
    %c0 = arith.constant 0 : index
    %5 = arith.index_cast %4 : i32 to index
    %c0_1 = arith.constant 0 : index
    %6 = vector.load %arg2[%c0, %5, %c0_1] : memref<1x8x32xf32, #tpu.memory_space<vmem>>, vector<1x8x32xf32>
    %7 = vector.shape_cast %6 : vector<1x8x32xf32> to vector<8x32xf32>
    %8 = arith.truncf %7 : vector<8x32xf32> to vector<8x32xbf16>
    %c0_2 = arith.constant 0 : index
    %c0_3 = arith.constant 0 : index
    %9 = vector.load %arg3[%c0_2, %c0_3] : memref<32x32xbf16, #tpu.memory_space<vmem>>, vector<32x32xbf16>
    %cst = arith.constant dense<0.000000e+00> : vector<8x32xf32>
    %10 = tpu.matmul %8, %9, %cst {dimension_numbers = #tpu.dot_dimension_numbers<[1], [0], [0], [1], [0, 0, 1, 1], [], []>} : vector<8x32xbf16>, vector<32x32xbf16>, vector<8x32xf32> -> vector<8x32xf32>
    %11 = vector.shape_cast %10 : vector<8x32xf32> to vector<8x4x8xf32>
    %12 = tpu.transpose %11, [1, 0, 2] : vector<8x4x8xf32> -> vector<4x8x8xf32>
    %13 = arith.truncf %12 : vector<4x8x8xf32> to vector<4x8x8xbf16>
    %cst_4 = arith.constant 0xFF800000 : f32
    %14 = vector.broadcast %cst_4 : f32 to vector<4x8x1xf32>
    %cst_5 = arith.constant 0.000000e+00 : f32
    %15 = vector.broadcast %cst_5 : f32 to vector<4x8x1xf32>
    %cst_6 = arith.constant 0.000000e+00 : f32
    %16 = vector.broadcast %cst_6 : f32 to vector<4x8x8xf32>
    %c0_7 = arith.constant 0 : index
    %c0_8 = arith.constant 0 : index
    %c0_9 = arith.constant 0 : index
    %17 = vector.load %arg10[%c0_7, %c0_8, %c0_9] : memref<4x8x8xbf16, #tpu.memory_space<vmem>>, vector<4x8x8xbf16>
    %c0_10 = arith.constant 0 : index
    %c0_11 = arith.constant 0 : index
    %c0_12 = arith.constant 0 : index
    %18 = vector.load %arg11[%c0_10, %c0_11, %c0_12] : memref<4x8x8xbf16, #tpu.memory_space<vmem>>, vector<4x8x8xbf16>
    "tpu.trace_start"() <{level = 10 : i32, message = "hqd,hdk->hqk"}> : () -> ()
    %cst_13 = arith.constant dense<0.000000e+00> : vector<4x8x8xf32>
    %19 = tpu.matmul %13, %17, %cst_13 {dimension_numbers = #tpu.dot_dimension_numbers<[2], [1], [1], [2], [0, 0, 0, 1, 1, 2], [0], [0]>} : vector<4x8x8xbf16>, vector<4x8x8xbf16>, vector<4x8x8xf32> -> vector<4x8x8xf32>
    "tpu.trace_stop"() : () -> ()
    %cst_14 = arith.constant dense<0xFF800000> : vector<4x8xf32>
    %20 = vector.multi_reduction <maximumf>, %19, %cst_14 [2] : vector<4x8x8xf32> to vector<4x8xf32>
    %21 = vector.shape_cast %20 : vector<4x8xf32> to vector<4x8x1xf32>
    %22 = arith.maximumf %14, %21 : vector<4x8x1xf32>
    %23 = arith.subf %14, %22 : vector<4x8x1xf32>
    %24 = math.exp %23 : vector<4x8x1xf32>
    %25 = vector.broadcast %22 : vector<4x8x1xf32> to vector<4x8x8xf32>
    %26 = arith.subf %19, %25 : vector<4x8x8xf32>
    %27 = math.exp %26 : vector<4x8x8xf32>
    %28 = arith.mulf %24, %15 : vector<4x8x1xf32>
    %cst_15 = arith.constant dense<0.000000e+00> : vector<4x8xf32>
    %29 = vector.multi_reduction <add>, %27, %cst_15 [2] : vector<4x8x8xf32> to vector<4x8xf32>
    %30 = vector.shape_cast %29 : vector<4x8xf32> to vector<4x8x1xf32>
    %31 = arith.addf %28, %30 : vector<4x8x1xf32>
    %32 = vector.broadcast %24 : vector<4x8x1xf32> to vector<4x8x8xf32>
    %33 = arith.mulf %32, %16 : vector<4x8x8xf32>
    %34 = arith.truncf %27 : vector<4x8x8xf32> to vector<4x8x8xbf16>
    "tpu.trace_start"() <{level = 10 : i32, message = "hqk,hkd->hqd"}> : () -> ()
    %cst_16 = arith.constant dense<0.000000e+00> : vector<4x8x8xf32>
    %35 = tpu.matmul %34, %18, %cst_16 {dimension_numbers = #tpu.dot_dimension_numbers<[2], [1], [1], [2], [0, 0, 0, 1, 1, 2], [0], [0]>} : vector<4x8x8xbf16>, vector<4x8x8xbf16>, vector<4x8x8xf32> -> vector<4x8x8xf32>
    "tpu.trace_stop"() : () -> ()
    %36 = arith.addf %33, %35 : vector<4x8x8xf32>
    %37 = tpu.reciprocal %31 {approx = true} : vector<4x8x1xf32> -> vector<4x8x1xf32>
    %38 = vector.broadcast %37 : vector<4x8x1xf32> to vector<4x8x8xf32>
    %39 = arith.mulf %36, %38 : vector<4x8x8xf32>
    %40 = tpu.transpose %39, [1, 0, 2] : vector<4x8x8xf32> -> vector<8x4x8xf32>
    %41 = vector.shape_cast %40 : vector<8x4x8xf32> to vector<8x32xf32>
    %42 = arith.truncf %41 : vector<8x32xf32> to vector<8x32xbf16>
    %c0_17 = arith.constant 0 : index
    %c0_18 = arith.constant 0 : index
    %43 = vector.load %arg6[%c0_17, %c0_18] : memref<32x32xbf16, #tpu.memory_space<vmem>>, vector<32x32xbf16>
    %cst_19 = arith.constant dense<0.000000e+00> : vector<8x32xf32>
    %44 = tpu.matmul %42, %43, %cst_19 {dimension_numbers = #tpu.dot_dimension_numbers<[1], [0], [0], [1], [0, 0, 1, 1], [], []>} : vector<8x32xbf16>, vector<32x32xbf16>, vector<8x32xf32> -> vector<8x32xf32>
    %45 = arith.addf %7, %44 : vector<8x32xf32>
    %cst_20 = arith.constant dense<0.000000e+00> : vector<8xf32>
    %46 = vector.multi_reduction <add>, %45, %cst_20 [1] : vector<8x32xf32> to vector<8xf32>
    %47 = vector.shape_cast %46 : vector<8xf32> to vector<8x1xf32>
    %cst_21 = arith.constant 3.200000e+01 : f32
    %48 = vector.broadcast %cst_21 : f32 to vector<8x1xf32>
    %49 = arith.divf %47, %48 : vector<8x1xf32>
    %50 = vector.broadcast %49 : vector<8x1xf32> to vector<8x32xf32>
    %51 = arith.subf %45, %50 : vector<8x32xf32>
    %52 = vector.broadcast %49 : vector<8x1xf32> to vector<8x32xf32>
    %53 = arith.subf %45, %52 : vector<8x32xf32>
    %54 = arith.mulf %51, %53 : vector<8x32xf32>
    %cst_22 = arith.constant dense<0.000000e+00> : vector<8xf32>
    %55 = vector.multi_reduction <add>, %54, %cst_22 [1] : vector<8x32xf32> to vector<8xf32>
    %56 = vector.shape_cast %55 : vector<8xf32> to vector<8x1xf32>
    %cst_23 = arith.constant 3.200000e+01 : f32
    %57 = vector.broadcast %cst_23 : f32 to vector<8x1xf32>
    %58 = arith.divf %56, %57 : vector<8x1xf32>
    %59 = vector.broadcast %49 : vector<8x1xf32> to vector<8x32xf32>
    %60 = arith.subf %45, %59 : vector<8x32xf32>
    %cst_24 = arith.constant 9.99999974E-6 : f32
    %61 = vector.broadcast %cst_24 : f32 to vector<8x1xf32>
    %62 = arith.addf %58, %61 : vector<8x1xf32>
    %63 = math.rsqrt %62 : vector<8x1xf32>
    %64 = vector.broadcast %63 : vector<8x1xf32> to vector<8x32xf32>
    %65 = arith.mulf %60, %64 : vector<8x32xf32>
    %c0_25 = arith.constant 0 : index
    %c0_26 = arith.constant 0 : index
    %66 = vector.load %arg7[%c0_25, %c0_26] : memref<1x32xf32, #tpu.memory_space<vmem>>, vector<1x32xf32>
    %67 = vector.broadcast %66 : vector<1x32xf32> to vector<8x32xf32>
    %68 = arith.mulf %65, %67 : vector<8x32xf32>
    %c0_27 = arith.constant 0 : index
    %c0_28 = arith.constant 0 : index
    %69 = vector.load %arg8[%c0_27, %c0_28] : memref<1x32xf32, #tpu.memory_space<vmem>>, vector<1x32xf32>
    %70 = vector.broadcast %69 : vector<1x32xf32> to vector<8x32xf32>
    %71 = arith.addf %68, %70 : vector<8x32xf32>
    %c0_29 = arith.constant 0 : index
    %c0_30 = arith.constant 0 : index
    %c0_31 = arith.constant 0 : index
    %72 = vector.load %arg9[%c0_29, %c0_30, %c0_31] : memref<1x8x32xf32, #tpu.memory_space<vmem>>, vector<1x8x32xf32>
    %73 = vector.shape_cast %72 : vector<1x8x32xf32> to vector<8x32xf32>
    %74 = vector.shape_cast %71 : vector<8x32xf32> to vector<1x8x32xf32>
    tpu.vector_store %arg9[%c0_29, %c0_30, %c0_31], %74 {strides = array<i32>} : memref<1x8x32xf32, #tpu.memory_space<vmem>>, vector<1x8x32xf32>,
    return
  }
  func.func @transform_0(%arg0: i32, %arg1: i32) -> (i32, i32, i32) {
    %c0_i32 = arith.constant 0 : i32
    %c0_i32_0 = arith.constant 0 : i32
    %c0_i32_1 = arith.constant 0 : i32
    return %arg0, %c0_i32, %c0_i32_0 : i32, i32, i32
  }
  func.func @transform_1(%arg0: i32, %arg1: i32) -> (i32, i32) {
    %c0_i32 = arith.constant 0 : i32
    %c0_i32_0 = arith.constant 0 : i32
    %c0_i32_1 = arith.constant 0 : i32
    return %c0_i32, %c0_i32_0 : i32, i32
  }
  func.func @transform_2(%arg0: i32, %arg1: i32) -> (i32, i32) {
    %c0_i32 = arith.constant 0 : i32
    %c0_i32_0 = arith.constant 0 : i32
    %c0_i32_1 = arith.constant 0 : i32
    return %c0_i32, %c0_i32_0 : i32, i32
  }
  func.func @transform_3(%arg0: i32, %arg1: i32) -> (i32, i32) {
    %c0_i32 = arith.constant 0 : i32
    %c0_i32_0 = arith.constant 0 : i32
    %c0_i32_1 = arith.constant 0 : i32
    return %c0_i32, %c0_i32_0 : i32, i32
  }
  func.func @transform_4(%arg0: i32, %arg1: i32) -> (i32, i32) {
    %c0_i32 = arith.constant 0 : i32
    %c0_i32_0 = arith.constant 0 : i32
    %c0_i32_1 = arith.constant 0 : i32
    return %c0_i32, %c0_i32_0 : i32, i32
  }
  func.func @transform_5(%arg0: i32, %arg1: i32) -> (i32, i32) {
    %c0_i32 = arith.constant 0 : i32
    %c0_i32_0 = arith.constant 0 : i32
    %c0_i32_1 = arith.constant 0 : i32
    return %c0_i32, %c0_i32_0 : i32, i32
  }
  func.func @transform_6(%arg0: i32, %arg1: i32) -> (i32, i32) {
    %c0_i32 = arith.constant 0 : i32
    %c0_i32_0 = arith.constant 0 : i32
    %c0_i32_1 = arith.constant 0 : i32
    return %c0_i32, %c0_i32_0 : i32, i32
  }
  func.func @transform_7(%arg0: i32, %arg1: i32) -> (i32, i32, i32) {
    %c0_i32 = arith.constant 0 : i32
    %c0_i32_0 = arith.constant 0 : i32
    return %arg0, %arg1, %c0_i32 : i32, i32, i32
  }
}

</mosaic_0001>

<llo_original>
// kernel: tpu_custom_call.1
$region0: #{tpu_custom_call.1}
  #allocation0 [shape = 'u32[]', space=smem, size = 0x4, offset = 0x4, fixed_abs, tag = 'smem constant byte address 0x4 - core index']
  #allocation1 [shape = 'u32[72,128]{1,0:T(1,128)}', space=vmem, size = 0x9000, scoped, tag = 'internal scratch']
  #allocation2 [shape = 'bf16[4,8,8]{2,1,0:T(8,128)(2,1)}', space=vmem, size = 0x2000, scoped, tag = 'scratch operand']
  #allocation3 [shape = 'bf16[4,8,8]{2,1,0:T(8,128)(2,1)}', space=vmem, size = 0x2000, scoped, tag = 'scratch operand']
  %s0 = inlined_call_operand.hbm [shape: f32[2,8,32], index: 0, kind: input, shape index: {}]
  %s1 = inlined_call_operand.hbm [shape: bf16[32,32], index: 1, kind: input, shape index: {}]
  %s2 = inlined_call_operand.hbm [shape: bf16[32,32], index: 2, kind: input, shape index: {}]
  %s3 = inlined_call_operand.hbm [shape: bf16[32,32], index: 3, kind: input, shape index: {}]
  %s4 = inlined_call_operand.hbm [shape: bf16[32,32], index: 4, kind: input, shape index: {}]
  %s5 = inlined_call_operand.vmem [shape: f32[1,32], index: 5, kind: input, shape index: {}]
  %s6 = inlined_call_operand.vmem [shape: f32[1,32], index: 6, kind: input, shape index: {}]
  %s7 = inlined_call_operand.hbm [shape: f32[2,8,32], index: 7, kind: output, shape index: {}]
  %s8 = sld [smem:[#allocation0]]
  $region85: #{tpu_custom_call.1} parent=0
    _
  %s10 = ssub.s32 1, %s8
  %s11 = scalar_select 0, %s10, %s8
  $region1: #{tpu_custom_call.1} parent=0
    #allocation4 [shape = 'u8[8192]{0}', space=vmem, size = 0x2000, scoped, tag = 'input window, operand 0']
    #allocation5 [shape = 's32[2]{0}', space=sflag, size = 0x8, scoped, tag = 'scoped memory for tpu_custom_call.1']
    #allocation6 [shape = 's32[2]{0}', space=sflag, size = 0x8, scoped, tag = 'scoped memory for tpu_custom_call.1']
    #allocation7 [shape = 'u8[8192]{0}', space=vmem, size = 0x2000, scoped, tag = 'input window, operand 1, single buffered']
    #allocation8 [shape = 's32[1]{0}', space=sflag, size = 0x4, scoped, tag = 'scoped memory for tpu_custom_call.1']
    #allocation9 [shape = 'u8[8192]{0}', space=vmem, size = 0x2000, scoped, tag = 'input window, operand 2, single buffered']
    #allocation10 [shape = 'u8[8192]{0}', space=vmem, size = 0x2000, scoped, tag = 'input window, operand 3, single buffered']
    #allocation11 [shape = 's32[1]{0}', space=sflag, size = 0x4, scoped, tag = 'scoped memory for tpu_custom_call.1']
    #allocation12 [shape = 'u8[8192]{0}', space=vmem, size = 0x2000, scoped, tag = 'input window, operand 4, single buffered']
    #allocation13 [shape = 'u8[8192]{0}', space=vmem, size = 0x2000, scoped, tag = 'output window, operand 0']
    %12 = vsyncpa [#allocation5], 0
    %s13 = scalar_lea.sflag [#allocation5], 1
    %14 = vsyncpa %s13, 0
    %15 = vsyncpa [#allocation8], 0
    %16 = vsyncpa [#allocation11], 0
    %17 = vsyncpa [#allocation6], 0
    %s18 = scalar_lea.sflag [#allocation6], 1
    %19 = vsyncpa %s18, 0
    loop: start=0, step=1, limit=4
    $region2: #{tpu_custom_call.1} parent=1 // loop_pre_header
      _
    $region3: #{tpu_custom_call.1} parent=1 // loop_header
      %s21 = sphi 0, %s25
      %p22 = scmp.ge.s32.totalorder %s21, 4
      %s28 = sphi 0, %s40
      %s29 = sphi 0, %s36
      %s30 = sphi 0, %s28
      %s31 = sphi 0, %s29
      %s32 = sphi 0, %s30
      %s33 = sphi 0, %s31
      %s43 = sphi 0, %s45
      %s46 = sphi 0, %s43
      %s47 = sphi 0, %s46
      %s63 = sphi 0, %s47
      %s67 = sphi 0, %s67
      %s69 = sphi 0, %s67
      %s70 = sphi 0, %s69
      %s84 = sphi 0, %s70
      %s88 = sphi 0, %s88
      %s90 = sphi 0, %s88
      %s91 = sphi 0, %s90
      %s105 = sphi 0, %s91
      %s109 = sphi 0, %s109
      %s111 = sphi 0, %s109
      %s112 = sphi 0, %s111
      %s126 = sphi 0, %s112
      %s130 = sphi 0, %s130
      %s132 = sphi 0, %s130
      %s133 = sphi 0, %s132
      %s147 = sphi 0, %s133
      %s151 = sphi 0, %s151
      %s153 = sphi 0, %s151
      %s154 = sphi 0, %s153
      %s168 = sphi 0, %s154
      %s172 = sphi 0, %s172
      %s174 = sphi 0, %s172
      %s175 = sphi 0, %s174
      %s189 = sphi 0, %s175
      %s197 = sphi 0, %s199
      %s200 = sphi 0, %s197
      %s201 = sphi 0, %s200
      %s217 = sphi 0, %s201
    $region4: #{tpu_custom_call.1} parent=1 // loop_header_branch
      %24 = sbr.rel (%p22) target = $region8
    $region5: #{tpu_custom_call.1} parent=1 // loop_body
      %s26 = ssub.s32 %s21, 1
      %s27 = ssub.s32 %s21, 2
      %s34 = sadd.s32 1, %s29
      %p35 = scmp.ge.s32.totalorder %s34, 1
      %s36 = scalar_select %p35, 0, %s34
      %s37 = sadd.s32 1, %s28
      %s38 = scalar_select %p35, %s37, %s28
      %p39 = scmp.ge.s32.totalorder %s38, 2
      %s40 = scalar_select %p39, 0, %s38
      %s41 = ssub.s32 %s28, %s40
      %p42 = scmp.eq.s32.totalorder %s41, 0
      %s44 = sadd.s32 %s43, 1
      %s45 = scalar_select %p42, %s43, %s44
      %p48 = pneg %p42
      %p49 = scmp.eq.s32.totalorder %s21, 1
      %p50 = por %p48, %p49
      %p51 = scmp.ne.s32.totalorder %s43, %s46
      %p52 = scmp.eq.s32.totalorder %s21, 0
      %p53 = por %p51, %p52
      %p54 = scmp.ne.s32.totalorder %s43, %s46
      %p55 = scmp.eq.s32.totalorder %s26, 1
      %p56 = por %p54, %p55
      %p57 = scmp.ne.s32.totalorder %s46, %s47
      %p58 = scmp.eq.s32.totalorder %s26, 0
      %p59 = por %p57, %p58
      %p60 = scmp.ne.s32.totalorder %s46, %s47
      %p61 = scmp.eq.s32.totalorder %s27, 1
      %p62 = por %p60, %p61
      %p64 = scmp.ne.s32.totalorder %s47, %s63
      %p65 = scmp.eq.s32.totalorder %s27, 0
      %p66 = por %p64, %p65
      %s68 = sadd.s32 %s67, 1
      %p71 = scmp.eq.s32.totalorder %s21, 1
      %p72 = scmp.ne.s32.totalorder %s67, %s69
      %p73 = scmp.eq.s32.totalorder %s21, 0
      %p74 = por %p72, %p73
      %p75 = scmp.ne.s32.totalorder %s67, %s69
      %p76 = scmp.eq.s32.totalorder %s26, 1
      %p77 = por %p75, %p76
      %p78 = scmp.ne.s32.totalorder %s69, %s70
      %p79 = scmp.eq.s32.totalorder %s26, 0
      %p80 = por %p78, %p79
      %p81 = scmp.ne.s32.totalorder %s69, %s70
      %p82 = scmp.eq.s32.totalorder %s27, 1
      %p83 = por %p81, %p82
      %p85 = scmp.ne.s32.totalorder %s70, %s84
      %p86 = scmp.eq.s32.totalorder %s27, 0
      %p87 = por %p85, %p86
      %s89 = sadd.s32 %s88, 1
      %p92 = scmp.eq.s32.totalorder %s21, 1
      %p93 = scmp.ne.s32.totalorder %s88, %s90
      %p94 = scmp.eq.s32.totalorder %s21, 0
      %p95 = por %p93, %p94
      %p96 = scmp.ne.s32.totalorder %s88, %s90
      %p97 = scmp.eq.s32.totalorder %s26, 1
      %p98 = por %p96, %p97
      %p99 = scmp.ne.s32.totalorder %s90, %s91
      %p100 = scmp.eq.s32.totalorder %s26, 0
      %p101 = por %p99, %p100
      %p102 = scmp.ne.s32.totalorder %s90, %s91
      %p103 = scmp.eq.s32.totalorder %s27, 1
      %p104 = por %p102, %p103
      %p106 = scmp.ne.s32.totalorder %s91, %s105
      %p107 = scmp.eq.s32.totalorder %s27, 0
      %p108 = por %p106, %p107
      %s110 = sadd.s32 %s109, 1
      %p113 = scmp.eq.s32.totalorder %s21, 1
      %p114 = scmp.ne.s32.totalorder %s109, %s111
      %p115 = scmp.eq.s32.totalorder %s21, 0
      %p116 = por %p114, %p115
      %p117 = scmp.ne.s32.totalorder %s109, %s111
      %p118 = scmp.eq.s32.totalorder %s26, 1
      %p119 = por %p117, %p118
      %p120 = scmp.ne.s32.totalorder %s111, %s112
      %p121 = scmp.eq.s32.totalorder %s26, 0
      %p122 = por %p120, %p121
      %p123 = scmp.ne.s32.totalorder %s111, %s112
      %p124 = scmp.eq.s32.totalorder %s27, 1
      %p125 = por %p123, %p124
      %p127 = scmp.ne.s32.totalorder %s112, %s126
      %p128 = scmp.eq.s32.totalorder %s27, 0
      %p129 = por %p127, %p128
      %s131 = sadd.s32 %s130, 1
      %p134 = scmp.eq.s32.totalorder %s21, 1
      %p135 = scmp.ne.s32.totalorder %s130, %s132
      %p136 = scmp.eq.s32.totalorder %s21, 0
      %p137 = por %p135, %p136
      %p138 = scmp.ne.s32.totalorder %s130, %s132
      %p139 = scmp.eq.s32.totalorder %s26, 1
      %p140 = por %p138, %p139
      %p141 = scmp.ne.s32.totalorder %s132, %s133
      %p142 = scmp.eq.s32.totalorder %s26, 0
      %p143 = por %p141, %p142
      %p144 = scmp.ne.s32.totalorder %s132, %s133
      %p145 = scmp.eq.s32.totalorder %s27, 1
      %p146 = por %p144, %p145
      %p148 = scmp.ne.s32.totalorder %s133, %s147
      %p149 = scmp.eq.s32.totalorder %s27, 0
      %p150 = por %p148, %p149
      %s152 = sadd.s32 %s151, 1
      %p155 = scmp.eq.s32.totalorder %s21, 1
      %p156 = scmp.ne.s32.totalorder %s151, %s153
      %p157 = scmp.eq.s32.totalorder %s21, 0
      %p158 = por %p156, %p157
      %p159 = scmp.ne.s32.totalorder %s151, %s153
      %p160 = scmp.eq.s32.totalorder %s26, 1
      %p161 = por %p159, %p160
      %p162 = scmp.ne.s32.totalorder %s153, %s154
      %p163 = scmp.eq.s32.totalorder %s26, 0
      %p164 = por %p162, %p163
      %p165 = scmp.ne.s32.totalorder %s153, %s154
      %p166 = scmp.eq.s32.totalorder %s27, 1
      %p167 = por %p165, %p166
      %p169 = scmp.ne.s32.totalorder %s154, %s168
      %p170 = scmp.eq.s32.totalorder %s27, 0
      %p171 = por %p169, %p170
      %s173 = sadd.s32 %s172, 1
      %p176 = scmp.eq.s32.totalorder %s21, 1
      %p177 = scmp.ne.s32.totalorder %s172, %s174
      %p178 = scmp.eq.s32.totalorder %s21, 0
      %p179 = por %p177, %p178
      %p180 = scmp.ne.s32.totalorder %s172, %s174
      %p181 = scmp.eq.s32.totalorder %s26, 1
      %p182 = por %p180, %p181
      %p183 = scmp.ne.s32.totalorder %s174, %s175
      %p184 = scmp.eq.s32.totalorder %s26, 0
      %p185 = por %p183, %p184
      %p186 = scmp.ne.s32.totalorder %s174, %s175
      %p187 = scmp.eq.s32.totalorder %s27, 1
      %p188 = por %p186, %p187
      %p190 = scmp.ne.s32.totalorder %s175, %s189
      %p191 = scmp.eq.s32.totalorder %s27, 0
      %p192 = por %p190, %p191
      %s193 = ssub.s32 %s28, %s40
      %s194 = ssub.s32 %s29, %s36
      %s195 = sor.u32 %s193, %s194
      %p196 = scmp.eq.s32.totalorder %s195, 0
      %s198 = sadd.s32 %s197, 1
      %s199 = scalar_select %p196, %s197, %s198
      %p202 = pneg %p196
      %p203 = scmp.eq.s32.totalorder %s21, 1
      %p204 = por %p202, %p203
      %p205 = scmp.ne.s32.totalorder %s197, %s200
      %p206 = scmp.eq.s32.totalorder %s21, 0
      %p207 = por %p205, %p206
      %p208 = scmp.ne.s32.totalorder %s197, %s200
      %p209 = scmp.eq.s32.totalorder %s26, 1
      %p210 = por %p208, %p209
      %p211 = scmp.ne.s32.totalorder %s200, %s201
      %p212 = scmp.eq.s32.totalorder %s26, 0
      %p213 = por %p211, %p212
      %p214 = scmp.ne.s32.totalorder %s200, %s201
      %p215 = scmp.eq.s32.totalorder %s27, 1
      %p216 = por %p214, %p215
      %p218 = scmp.ne.s32.totalorder %s201, %s217
      %p219 = scmp.eq.s32.totalorder %s27, 0
      %p220 = por %p218, %p219
      %p221 = scmp.le.s32.totalorder 1, %s21
      %p222 = scmp.lt.s32.totalorder %s21, 3
      %p223 = pnand %p221, %p222
      %p224 = pneg %p223
      // Predicated region
      $region9: #{tpu_custom_call.1} parent=5 // pred_check
        _
      $region10: #{tpu_custom_call.1} parent=5 // pred_check_branch
        %226 = sbr.rel (%p223) target = $region12
      $region11: #{tpu_custom_call.1} parent=5 // pred_region
        %s227 = ssub.s32 %s21, 1
        // Predicated region
        $region13: #{tpu_custom_call.1} parent=11 // pred_check
          %p228 = pneg %p80
        $region14: #{tpu_custom_call.1} parent=11 // pred_check_branch
          %230 = sbr.rel (%p228) target = $region16
        $region15: #{tpu_custom_call.1} parent=11 // pred_region
          %232 = vsyncadd [#allocation8], 0
          %s233 = sshll.u32 %s1, 4
          %s234 = int_to_ptr.hbm [resolvable:$true] %s233
          %s235 = sshll.u32 [#allocation7], 4
          %s236 = int_to_ptr.vmem [resolvable:$true] %s235
          %241 = dma.hbm_to_vmem [thread:$0]  %s234, 256, %s236, [#allocation8], 64, 64, 4
        $region16: #{tpu_custom_call.1} parent=11 // pred_fallthru
          _
        // Predicated region
        $region17: #{tpu_custom_call.1} parent=11 // pred_check
          %p242 = pneg %p101
        $region18: #{tpu_custom_call.1} parent=11 // pred_check_branch
          %244 = sbr.rel (%p242) target = $region20
        $region19: #{tpu_custom_call.1} parent=11 // pred_region
          %246 = vsyncadd [#allocation8], 0
          %s247 = sshll.u32 %s2, 4
          %s248 = int_to_ptr.hbm [resolvable:$true] %s247
          %s249 = sshll.u32 [#allocation9], 4
          %s250 = int_to_ptr.vmem [resolvable:$true] %s249
          %255 = dma.hbm_to_vmem [thread:$0]  %s248, 256, %s250, [#allocation8], 64, 64, 4
        $region20: #{tpu_custom_call.1} parent=11 // pred_fallthru
          _
        // Predicated region
        $region21: #{tpu_custom_call.1} parent=11 // pred_check
          %p256 = pneg %p122
        $region22: #{tpu_custom_call.1} parent=11 // pred_check_branch
          %258 = sbr.rel (%p256) target = $region24
        $region23: #{tpu_custom_call.1} parent=11 // pred_region
          %260 = vsyncadd [#allocation11], 0
          %s261 = sshll.u32 %s3, 4
          %s262 = int_to_ptr.hbm [resolvable:$true] %s261
          %s263 = sshll.u32 [#allocation10], 4
          %s264 = int_to_ptr.vmem [resolvable:$true] %s263
          %269 = dma.hbm_to_vmem [thread:$0]  %s262, 256, %s264, [#allocation11], 64, 64, 4
        $region24: #{tpu_custom_call.1} parent=11 // pred_fallthru
          _
        // Predicated region
        $region25: #{tpu_custom_call.1} parent=11 // pred_check
          %p270 = pneg %p143
        $region26: #{tpu_custom_call.1} parent=11 // pred_check_branch
          %272 = sbr.rel (%p270) target = $region28
        $region27: #{tpu_custom_call.1} parent=11 // pred_region
          %274 = vsyncadd [#allocation11], 0
          %s275 = sshll.u32 %s4, 4
          %s276 = int_to_ptr.hbm [resolvable:$true] %s275
          %s277 = sshll.u32 [#allocation12], 4
          %s278 = int_to_ptr.vmem [resolvable:$true] %s277
          %283 = dma.hbm_to_vmem [thread:$0]  %s276, 256, %s278, [#allocation11], 64, 64, 4
        $region28: #{tpu_custom_call.1} parent=11 // pred_fallthru
          _
        // Predicated region
        $region29: #{tpu_custom_call.1} parent=11 // pred_check
          %p284 = pneg %p164
        $region30: #{tpu_custom_call.1} parent=11 // pred_check_branch
          %286 = sbr.rel (%p284) target = $region32
        $region31: #{tpu_custom_call.1} parent=11 // pred_region
          _
        $region32: #{tpu_custom_call.1} parent=11 // pred_fallthru
          _
        // Predicated region
        $region33: #{tpu_custom_call.1} parent=11 // pred_check
          %p287 = pneg %p185
        $region34: #{tpu_custom_call.1} parent=11 // pred_check_branch
          %289 = sbr.rel (%p287) target = $region36
        $region35: #{tpu_custom_call.1} parent=11 // pred_region
          _
        $region36: #{tpu_custom_call.1} parent=11 // pred_fallthru
          _
      $region12: #{tpu_custom_call.1} parent=5 // pred_fallthru
        _
      %p290 = scmp.lt.s32.totalorder %s21, 2
      // Predicated region
      $region37: #{tpu_custom_call.1} parent=5 // pred_check
        %p291 = pneg %p290
      $region38: #{tpu_custom_call.1} parent=5 // pred_check_branch
        %293 = sbr.rel (%p291) target = $region40
      $region39: #{tpu_custom_call.1} parent=5 // pred_region
        // Predicated region
        $region41: #{tpu_custom_call.1} parent=39 // pred_check
          %p294 = pneg %p53
        $region42: #{tpu_custom_call.1} parent=39 // pred_check_branch
          %296 = sbr.rel (%p294) target = $region44
        $region43: #{tpu_custom_call.1} parent=39 // pred_region
          %s297 = sand.u32 %s43, 1
          %s298 = scalar_lea.sflag [#allocation5], %s297
          %s299 = sand.u32 %s43, 1
          %s300 = smul.addr %s299, 8
          %s301 = scalar_lea.vmem [#allocation4], %s300
          %303 = vsyncadd %s298, 0
          %s304 = smul.addr %s28, 8
          %s305 = scalar_lea.hbm %s0, %s304
          %s307 = sshll.u32 %s305, 4
          %s308 = int_to_ptr.hbm [resolvable:$true] %s307
          %s309 = sshll.u32 %s301, 4
          %s310 = int_to_ptr.vmem [resolvable:$true] %s309
          %312 = dma.hbm_to_vmem [thread:$0]  %s308, 128, %s310, %s298
        $region44: #{tpu_custom_call.1} parent=39 // pred_fallthru
          _
      $region40: #{tpu_custom_call.1} parent=5 // pred_fallthru
        _
      %p313 = scmp.le.s32.totalorder 1, %s21
      %p314 = scmp.lt.s32.totalorder %s21, 3
      %p315 = pnand %p313, %p314
      %p316 = pneg %p315
      // Predicated region
      $region45: #{tpu_custom_call.1} parent=5 // pred_check
        _
      $region46: #{tpu_custom_call.1} parent=5 // pred_check_branch
        %318 = sbr.rel (%p315) target = $region48
      $region47: #{tpu_custom_call.1} parent=5 // pred_region
        %s319 = ssub.s32 %s21, 1
        %s320 = sand.u32 %s46, 1
        %s321 = scalar_lea.sflag [#allocation5], %s320
        %s322 = sand.u32 %s46, 1
        %s323 = smul.addr %s322, 8
        %s324 = scalar_lea.vmem [#allocation4], %s323
        // Predicated region
        $region49: #{tpu_custom_call.1} parent=47 // pred_check
          %p325 = pneg %p59
        $region50: #{tpu_custom_call.1} parent=47 // pred_check_branch
          %327 = sbr.rel (%p325) target = $region52
        $region51: #{tpu_custom_call.1} parent=47 // pred_region
          %329 = dma.done %s321, 128
        $region52: #{tpu_custom_call.1} parent=47 // pred_fallthru
          _
        // Predicated region
        $region53: #{tpu_custom_call.1} parent=47 // pred_check
          %p330 = pneg %p80
        $region54: #{tpu_custom_call.1} parent=47 // pred_check_branch
          %332 = sbr.rel (%p330) target = $region56
        $region55: #{tpu_custom_call.1} parent=47 // pred_region
          %334 = dma.done [#allocation8], 256
        $region56: #{tpu_custom_call.1} parent=47 // pred_fallthru
          _
        // Predicated region
        $region57: #{tpu_custom_call.1} parent=47 // pred_check
          %p335 = pneg %p101
        $region58: #{tpu_custom_call.1} parent=47 // pred_check_branch
          %337 = sbr.rel (%p335) target = $region60
        $region59: #{tpu_custom_call.1} parent=47 // pred_region
          %339 = dma.done [#allocation8], 256
        $region60: #{tpu_custom_call.1} parent=47 // pred_fallthru
          _
        // Predicated region
        $region61: #{tpu_custom_call.1} parent=47 // pred_check
          %p340 = pneg %p122
        $region62: #{tpu_custom_call.1} parent=47 // pred_check_branch
          %342 = sbr.rel (%p340) target = $region64
        $region63: #{tpu_custom_call.1} parent=47 // pred_region
          %344 = dma.done [#allocation11], 256
        $region64: #{tpu_custom_call.1} parent=47 // pred_fallthru
          _
        // Predicated region
        $region65: #{tpu_custom_call.1} parent=47 // pred_check
          %p345 = pneg %p143
        $region66: #{tpu_custom_call.1} parent=47 // pred_check_branch
          %347 = sbr.rel (%p345) target = $region68
        $region67: #{tpu_custom_call.1} parent=47 // pred_region
          %349 = dma.done [#allocation11], 256
        $region68: #{tpu_custom_call.1} parent=47 // pred_fallthru
          _
        %s350 = sand.u32 %s46, 1
        %s351 = scalar_lea.sflag [#allocation5], %s350
        %s352 = sand.u32 %s46, 1
        %s353 = smul.addr %s352, 8
        %s354 = scalar_lea.vmem [#allocation4], %s353
        %p355 = pneg %p59
        %p356 = pneg %p56
        %p357 = pneg %p80
        %p358 = pneg %p77
        %p359 = pneg %p101
        %p360 = pneg %p98
        %p361 = pneg %p122
        %p362 = pneg %p119
        %p363 = pneg %p143
        %p364 = pneg %p140
        %p365 = pneg %p164
        %p366 = pneg %p161
        %p367 = pneg %p185
        %p368 = pneg %p182
        %p369 = pneg %p213
        %p370 = pneg %p210
        %s371 = sand.u32 %s200, 1
        %s372 = scalar_lea.sflag [#allocation6], %s371
        %s373 = sand.u32 %s200, 1
        %s374 = smul.addr %s373, 8
        %s375 = scalar_lea.vmem [#allocation13], %s374
        %p377 = scmp.eq.s32.totalorder %s31, 0
        // Predicated region
        $region69: #{tpu_custom_call.1} parent=47 // pred_check
          %p378 = pneg %p377
        $region70: #{tpu_custom_call.1} parent=47 // pred_check_branch
          %380 = sbr.rel (%p378) target = $region72
        $region71: #{tpu_custom_call.1} parent=47 // pred_region
          %v381 = vld [vmem:[%s324] sm:$0xff]
          %382 = vxpose.xlu0.b32.start [1/16] %v381, 128
          %383 = vxpose.xlu0.b32.cont [2/16] 0.0, 128
          %384 = vxpose.xlu0.b32.cont [3/16] 0.0, 128
          %385 = vxpose.xlu0.b32.cont [4/16] 0.0, 128
          %386 = vxpose.xlu0.b32.cont [5/16] 0.0, 128
          %387 = vxpose.xlu0.b32.cont [6/16] 0.0, 128
          %388 = vxpose.xlu0.b32.cont [7/16] 0.0, 128
          %389 = vxpose.xlu0.b32.cont [8/16] 0.0, 128
          %390 = vxpose.xlu0.b32.cont [9/16] 0.0, 128
          %391 = vxpose.xlu0.b32.cont [10/16] 0.0, 128
          %392 = vxpose.xlu0.b32.cont [11/16] 0.0, 128
          %393 = vxpose.xlu0.b32.cont [12/16] 0.0, 128
          %394 = vxpose.xlu0.b32.cont [13/16] 0.0, 128
          %395 = vxpose.xlu0.b32.cont [14/16] 0.0, 128
          %396 = vxpose.xlu0.b32.cont [15/16] 0.0, 128
          %397 = vxpose.xlu0.b32.end [16/16] 0.0, 128
          %v398 = vpop.trf.xlu0
          %v399 = vpop.trf.xlu0
          %v400 = vpop.trf.xlu0
          %v401 = vpop.trf.xlu0
          %v402 = vpop.trf.xlu0
          %v403 = vpop.trf.xlu0
          %v404 = vpop.trf.xlu0
          %v405 = vpop.trf.xlu0
          %v406 = vpop.trf.xlu0
          %v407 = vpop.trf.xlu0
          %v408 = vpop.trf.xlu0
          %v409 = vpop.trf.xlu0
          %v410 = vpop.trf.xlu0
          %v411 = vpop.trf.xlu0
          %v412 = vpop.trf.xlu0
          %v413 = vpop.trf.xlu0
          %v414 = vpack.c.bf16 %v399, %v398
          %v415 = vpack.c.bf16 %v401, %v400
          %v416 = vld [vmem:[#allocation9] sm:$0xf]
          %v417 = vld [vmem:[#allocation9 + $0x4] sm:$0xf]
          %v418 = vld [vmem:[#allocation9 + $0x8] sm:$0xf]
          %v419 = vld [vmem:[#allocation9 + $0xc] sm:$0xf]
          %v424 = vunpack.c.l.b16 %v416
          %v425 = vunpack.c.l.b16 %v417
          %v426 = vunpack.c.l.b16 %v418
          %v427 = vunpack.c.l.b16 %v419
          %v428 = vpack.c.b16 %v425, %v424
          %v429 = vpack.c.b16 %v427, %v426
          %vm430 = vcmask 261120
          %v432 = vsel %vm430, %v428, 0
          %v435 = vsel %vm430, %v429, 0
          %437 = vmatpush.bf16.msra.mxu0 0
          %438 = vmatpush.bf16.msra.mxu0 0
          %439 = vmatpush.bf16.msra.mxu0 0
          %440 = vmatpush.bf16.msra.mxu0 0
          %441 = vmatpush.bf16.msra.mxu0 0
          %442 = vmatpush.bf16.msra.mxu0 0
          %443 = vmatpush.bf16.msra.mxu0 %v415
          %444 = vmatpush.bf16.msra.mxu0 %v414
          %445 = vmatmul.bf16.gmra.mxu0 %v432
          %v446 = vpop.f32.mrf.mxu0
          %v447 = vadd.f32 0.0, %v446
          %v448 = vpop.f32.mrf.mxu0
          %v449 = vadd.f32 0.0, %v448
          %450 = vmatmul.bf16.gmra.mxu0 %v435
          %v451 = vpop.f32.mrf.mxu0
          %v452 = vadd.f32 0.0, %v451
          %v453 = vpop.f32.mrf.mxu0
          %v454 = vadd.f32 0.0, %v453
          %455 = vdwg.mxu0
          %v456 = vpack.c.bf16 %v447, %v447
          %v457 = vpack.c.bf16 %v449, %v449
          %v458 = vpack.c.bf16 %v452, %v452
          %v459 = vpack.c.bf16 %v454, %v454
          %vm460 = vcmask 60416
          %461 = vst.msk [vmem:[#allocation2] sm:$0xf] %vm460, %v456
          %462 = vst.msk [vmem:[#allocation2 + $0x4] sm:$0xf] %vm460, %v457
          %463 = vst.msk [vmem:[#allocation2 + $0x8] sm:$0xf] %vm460, %v458
          %464 = vst.msk [vmem:[#allocation2 + $0xc] sm:$0xf] %vm460, %v459
          %v465 = vpack.c.bf16 %v381, %v381
          %v466 = vld [vmem:[#allocation10] sm:$0xf]
          %v467 = vld [vmem:[#allocation10 + $0x4] sm:$0xf]
          %v468 = vld [vmem:[#allocation10 + $0x8] sm:$0xf]
          %v469 = vld [vmem:[#allocation10 + $0xc] sm:$0xf]
          %v474 = vunpack.c.l.b16 %v466
          %v475 = vunpack.c.l.b16 %v467
          %v476 = vunpack.c.l.b16 %v468
          %v477 = vunpack.c.l.b16 %v469
          %v478 = vpack.c.b16 %v475, %v474
          %v479 = vpack.c.b16 %v477, %v476
          %v483 = vsel %vm430, %v465, 0
          %485 = vmatpush.bf16.msra.mxu0 0
          %486 = vmatpush.bf16.msra.mxu0 0
          %487 = vmatpush.bf16.msra.mxu0 0
          %488 = vmatpush.bf16.msra.mxu0 0
          %489 = vmatpush.bf16.msra.mxu0 0
          %490 = vmatpush.bf16.msra.mxu0 0
          %491 = vmatpush.bf16.msra.mxu0 %v479
          %492 = vmatpush.bf16.msra.mxu0 %v478
          %493 = vmatmul.bf16.gmra.mxu0 %v483
          %v494 = vpop.f32.mrf.mxu0
          %v495 = vadd.f32 0.0, %v494
          %v496 = vpop.f32.mrf.mxu0
          %497 = vdwg.mxu0
          %499 = vrot.lane.b32.xlu0 %v495, 120
          %v500 = vpop.permute.xlu0 %499
          %502 = vrot.lane.b32.xlu0 %v495, 112
          %v503 = vpop.permute.xlu0 %502
          %505 = vrot.lane.b32.xlu0 %v495, 104
          %v506 = vpop.permute.xlu0 %505
          %v508 = vrot.slane %v503, 4
          %vm509 = vcmask 1047556
          %v510 = vsel %vm509, %v508, %v495
          %v511 = vrot.slane %v495, 4
          %v512 = vsel %vm509, %v503, %v511
          %v514 = vunpack.c.l.s4 1983009808
          %v515 = vunpack.c.0.s8 %v514
          %v516 = vperm.slane %v510, %v515
          %v518 = vunpack.c.l.s4 1983009808
          %v519 = vunpack.c.0.s8 %v518
          %v520 = vperm.slane %v512, %v519
          %v521 = vrot.slane %v506, 4
          %v522 = vsel %vm509, %v521, %v500
          %v523 = vrot.slane %v500, 4
          %v524 = vsel %vm509, %v506, %v523
          %v526 = vunpack.c.l.s4 1983009808
          %v527 = vunpack.c.0.s8 %v526
          %v528 = vperm.slane %v522, %v527
          %v530 = vunpack.c.l.s4 1983009808
          %v531 = vunpack.c.0.s8 %v530
          %v532 = vperm.slane %v524, %v531
          %v533 = vrot.slane %v528, 4
          %v534 = vsel %vm509, %v533, %v516
          %v535 = vrot.slane %v516, 4
          %v536 = vsel %vm509, %v528, %v535
          %v538 = vunpack.c.l.s4 1934713408
          %v539 = vunpack.c.0.s8 %v538
          %v540 = vperm.slane %v534, %v539
          %v542 = vunpack.c.l.s4 1934713408
          %v543 = vunpack.c.0.s8 %v542
          %v544 = vperm.slane %v536, %v543
          %v545 = vrot.slane %v532, 4
          %v546 = vsel %vm509, %v545, %v520
          %v547 = vrot.slane %v520, 4
          %v548 = vsel %vm509, %v532, %v547
          %v550 = vunpack.c.l.s4 1934713408
          %v551 = vunpack.c.0.s8 %v550
          %v552 = vperm.slane %v546, %v551
          %v554 = vunpack.c.l.s4 1934713408
          %v555 = vunpack.c.0.s8 %v554
          %v556 = vperm.slane %v548, %v555
          %v557 = vrot.slane %v540, 4
          %v558 = vsel %vm509, 0.0, %v557
          %v559 = vrot.slane %v544, 4
          %v560 = vsel %vm509, 0.0, %v559
          %v561 = vrot.slane %v552, 4
          %v562 = vsel %vm509, 0.0, %v561
          %v563 = vrot.slane %v556, 4
          %v564 = vsel %vm509, 0.0, %v563
          %v565 = vsel %vm509, %v559, %v540
          %v567 = vunpack.c.l.s4 1983009808
          %v568 = vunpack.c.0.s8 %v567
          %v569 = vperm.slane %v565, %v568
          %v570 = vrot.slane %v560, 4
          %v571 = vsel %vm509, %v570, %v558
          %v573 = vunpack.c.l.s4 1983009808
          %v574 = vunpack.c.0.s8 %v573
          %v575 = vperm.slane %v571, %v574
          %v576 = vsel %vm509, %v563, %v552
          %v578 = vunpack.c.l.s4 1983009808
          %v579 = vunpack.c.0.s8 %v578
          %v580 = vperm.slane %v576, %v579
          %v581 = vrot.slane %v564, 4
          %v582 = vsel %vm509, %v581, %v562
          %v584 = vunpack.c.l.s4 1983009808
          %v585 = vunpack.c.0.s8 %v584
          %v586 = vperm.slane %v582, %v585
          %v587 = vrot.slane %v575, 4
          %v588 = vsel %vm509, %v587, %v569
          %v589 = vrot.slane %v569, 4
          %v590 = vsel %vm509, %v575, %v589
          %v592 = vunpack.c.l.s4 1934713408
          %v593 = vunpack.c.0.s8 %v592
          %v594 = vperm.slane %v588, %v593
          %v596 = vunpack.c.l.s4 1934713408
          %v597 = vunpack.c.0.s8 %v596
          %v598 = vperm.slane %v590, %v597
          %v599 = vrot.slane %v586, 4
          %v600 = vsel %vm509, %v599, %v580
          %v601 = vrot.slane %v580, 4
          %v602 = vsel %vm509, %v586, %v601
          %v604 = vunpack.c.l.s4 1934713408
          %v605 = vunpack.c.0.s8 %v604
          %v606 = vperm.slane %v600, %v605
          %v608 = vunpack.c.l.s4 1934713408
          %v609 = vunpack.c.0.s8 %v608
          %v610 = vperm.slane %v602, %v609
          %v611 = vrot.slane %v606, 4
          %v612 = vsel %vm509, %v611, %v594
          %v613 = vrot.slane %v594, 4
          %v614 = vsel %vm509, %v606, %v613
          %v615 = vrot.slane %v610, 4
          %v616 = vsel %vm509, %v615, %v598
          %v617 = vrot.slane %v598, 4
          %v618 = vsel %vm509, %v610, %v617
          %v619 = vpack.c.bf16 %v612, %v612
          %v620 = vpack.c.bf16 %v614, %v614
          %v621 = vpack.c.bf16 %v616, %v616
          %v622 = vpack.c.bf16 %v618, %v618
          %623 = vst.msk [vmem:[#allocation3] sm:$0xf] %vm460, %v619
          %624 = vst.msk [vmem:[#allocation3 + $0x4] sm:$0xf] %vm460, %v620
          %625 = vst.msk [vmem:[#allocation3 + $0x8] sm:$0xf] %vm460, %v621
          %626 = vst.msk [vmem:[#allocation3 + $0xc] sm:$0xf] %vm460, %v622
        $region72: #{tpu_custom_call.1} parent=47 // pred_fallthru
          _
        %s627 = smul.u32 %s31, 8
        %s628 = scalar_lea.vmem %s324, %s627 [#allocation4]
        %v629 = vld [vmem:[%s628] sm:$0xff]
        %v630 = vpack.c.bf16 %v629, %v629
        %v631 = vld [vmem:[#allocation7] sm:$0xf]
        %v632 = vld [vmem:[#allocation7 + $0x4] sm:$0xf]
        %v633 = vld [vmem:[#allocation7 + $0x8] sm:$0xf]
        %v634 = vld [vmem:[#allocation7 + $0xc] sm:$0xf]
        %v639 = vunpack.c.l.b16 %v631
        %v640 = vunpack.c.l.b16 %v632
        %v641 = vunpack.c.l.b16 %v633
        %v642 = vunpack.c.l.b16 %v634
        %v643 = vpack.c.b16 %v640, %v639
        %v644 = vpack.c.b16 %v642, %v641
        %vm647 = vcmask 261120
        %v649 = vsel %vm647, %v630, 0
        %651 = vmatpush.bf16.msra.mxu0 0
        %652 = vmatpush.bf16.msra.mxu0 0
        %653 = vmatpush.bf16.msra.mxu0 0
        %654 = vmatpush.bf16.msra.mxu0 0
        %655 = vmatpush.bf16.msra.mxu0 0
        %656 = vmatpush.bf16.msra.mxu0 0
        %657 = vmatpush.bf16.msra.mxu0 %v644
        %658 = vmatpush.bf16.msra.mxu0 %v643
        %659 = vmatmul.bf16.gmra.mxu0 %v649
        %v660 = vpop.f32.mrf.mxu0
        %v661 = vadd.f32 0.0, %v660
        %v662 = vpop.f32.mrf.mxu0
        %663 = vdwg.mxu0
        %665 = vrot.lane.b32.xlu0 %v661, 120
        %v666 = vpop.permute.xlu0 %665
        %668 = vrot.lane.b32.xlu0 %v661, 112
        %v669 = vpop.permute.xlu0 %668
        %671 = vrot.lane.b32.xlu0 %v661, 104
        %v672 = vpop.permute.xlu0 %671
        %v674 = vrot.slane %v669, 4
        %vm675 = vcmask 1047556
        %v676 = vsel %vm675, %v674, %v661
        %v677 = vrot.slane %v661, 4
        %v678 = vsel %vm675, %v669, %v677
        %v680 = vunpack.c.l.s4 1983009808
        %v681 = vunpack.c.0.s8 %v680
        %v682 = vperm.slane %v676, %v681
        %v684 = vunpack.c.l.s4 1983009808
        %v685 = vunpack.c.0.s8 %v684
        %v686 = vperm.slane %v678, %v685
        %v687 = vrot.slane %v672, 4
        %v688 = vsel %vm675, %v687, %v666
        %v689 = vrot.slane %v666, 4
        %v690 = vsel %vm675, %v672, %v689
        %v692 = vunpack.c.l.s4 1983009808
        %v693 = vunpack.c.0.s8 %v692
        %v694 = vperm.slane %v688, %v693
        %v696 = vunpack.c.l.s4 1983009808
        %v697 = vunpack.c.0.s8 %v696
        %v698 = vperm.slane %v690, %v697
        %v699 = vrot.slane %v694, 4
        %v700 = vsel %vm675, %v699, %v682
        %v701 = vrot.slane %v682, 4
        %v702 = vsel %vm675, %v694, %v701
        %v704 = vunpack.c.l.s4 1934713408
        %v705 = vunpack.c.0.s8 %v704
        %v706 = vperm.slane %v700, %v705
        %v708 = vunpack.c.l.s4 1934713408
        %v709 = vunpack.c.0.s8 %v708
        %v710 = vperm.slane %v702, %v709
        %v711 = vrot.slane %v698, 4
        %v712 = vsel %vm675, %v711, %v686
        %v713 = vrot.slane %v686, 4
        %v714 = vsel %vm675, %v698, %v713
        %v716 = vunpack.c.l.s4 1934713408
        %v717 = vunpack.c.0.s8 %v716
        %v718 = vperm.slane %v712, %v717
        %v720 = vunpack.c.l.s4 1934713408
        %v721 = vunpack.c.0.s8 %v720
        %v722 = vperm.slane %v714, %v721
        %v723 = vrot.slane %v706, 4
        %v724 = vsel %vm675, 0.0, %v723
        %v725 = vrot.slane %v710, 4
        %v726 = vsel %vm675, 0.0, %v725
        %v727 = vrot.slane %v718, 4
        %v728 = vsel %vm675, 0.0, %v727
        %v729 = vrot.slane %v722, 4
        %v730 = vsel %vm675, 0.0, %v729
        %v731 = vsel %vm675, %v725, %v706
        %v733 = vunpack.c.l.s4 1983009808
        %v734 = vunpack.c.0.s8 %v733
        %v735 = vperm.slane %v731, %v734
        %v736 = vrot.slane %v726, 4
        %v737 = vsel %vm675, %v736, %v724
        %v739 = vunpack.c.l.s4 1983009808
        %v740 = vunpack.c.0.s8 %v739
        %v741 = vperm.slane %v737, %v740
        %v742 = vsel %vm675, %v729, %v718
        %v744 = vunpack.c.l.s4 1983009808
        %v745 = vunpack.c.0.s8 %v744
        %v746 = vperm.slane %v742, %v745
        %v747 = vrot.slane %v730, 4
        %v748 = vsel %vm675, %v747, %v728
        %v750 = vunpack.c.l.s4 1983009808
        %v751 = vunpack.c.0.s8 %v750
        %v752 = vperm.slane %v748, %v751
        %v753 = vrot.slane %v741, 4
        %v754 = vsel %vm675, %v753, %v735
        %v755 = vrot.slane %v735, 4
        %v756 = vsel %vm675, %v741, %v755
        %v758 = vunpack.c.l.s4 1934713408
        %v759 = vunpack.c.0.s8 %v758
        %v760 = vperm.slane %v754, %v759
        %v762 = vunpack.c.l.s4 1934713408
        %v763 = vunpack.c.0.s8 %v762
        %v764 = vperm.slane %v756, %v763
        %v765 = vrot.slane %v752, 4
        %v766 = vsel %vm675, %v765, %v746
        %v767 = vrot.slane %v746, 4
        %v768 = vsel %vm675, %v752, %v767
        %v770 = vunpack.c.l.s4 1934713408
        %v771 = vunpack.c.0.s8 %v770
        %v772 = vperm.slane %v766, %v771
        %v774 = vunpack.c.l.s4 1934713408
        %v775 = vunpack.c.0.s8 %v774
        %v776 = vperm.slane %v768, %v775
        %v777 = vrot.slane %v772, 4
        %v778 = vsel %vm675, %v777, %v760
        %v779 = vrot.slane %v760, 4
        %v780 = vsel %vm675, %v772, %v779
        %v781 = vrot.slane %v776, 4
        %v782 = vsel %vm675, %v781, %v764
        %v783 = vrot.slane %v764, 4
        %v784 = vsel %vm675, %v776, %v783
        %v785 = vpack.c.bf16 %v778, %v778
        %v786 = vpack.c.bf16 %v780, %v780
        %v787 = vpack.c.bf16 %v782, %v782
        %v788 = vpack.c.bf16 %v784, %v784
        %v789 = vld [vmem:[#allocation2] sm:$0xf]
        %v790 = vld [vmem:[#allocation2 + $0x4] sm:$0xf]
        %v791 = vld [vmem:[#allocation2 + $0x8] sm:$0xf]
        %v792 = vld [vmem:[#allocation2 + $0xc] sm:$0xf]
        %v793 = vld [vmem:[#allocation3] sm:$0xf]
        %v794 = vld [vmem:[#allocation3 + $0x4] sm:$0xf]
        %v795 = vld [vmem:[#allocation3 + $0x8] sm:$0xf]
        %v796 = vld [vmem:[#allocation3 + $0xc] sm:$0xf]
        %vm797 = vcmask 64512
        %v799 = vsel %vm797, %v785, 0
        %vm801 = vcmask 1043456
        %v803 = vsel %vm801, %v789, 0
        %805 = vmatpush.bf16.msra.mxu0 0
        %806 = vmatpush.bf16.msra.mxu0 0
        %807 = vmatpush.bf16.msra.mxu0 0
        %808 = vmatpush.bf16.msra.mxu0 0
        %809 = vmatpush.bf16.msra.mxu0 0
        %810 = vmatpush.bf16.msra.mxu0 0
        %811 = vmatpush.bf16.msra.mxu0 0
        %812 = vmatpush.bf16.msra.mxu0 %v803
        %813 = vmatmul.bf16.gmra.mxu0 %v799
        %v814 = vpop.f32.mrf.mxu0
        %v815 = vadd.f32 0.0, %v814
        %v816 = vpop.f32.mrf.mxu0
        %817 = vdwg.mxu0
        %v819 = vsel %vm797, %v786, 0
        %v822 = vsel %vm801, %v790, 0
        %824 = vmatpush.bf16.msra.mxu0 0
        %825 = vmatpush.bf16.msra.mxu0 0
        %826 = vmatpush.bf16.msra.mxu0 0
        %827 = vmatpush.bf16.msra.mxu0 0
        %828 = vmatpush.bf16.msra.mxu0 0
        %829 = vmatpush.bf16.msra.mxu0 0
        %830 = vmatpush.bf16.msra.mxu0 0
        %831 = vmatpush.bf16.msra.mxu0 %v822
        %832 = vmatmul.bf16.gmra.mxu0 %v819
        %v833 = vpop.f32.mrf.mxu0
        %v834 = vadd.f32 0.0, %v833
        %v835 = vpop.f32.mrf.mxu0
        %836 = vdwg.mxu0
        %v838 = vsel %vm797, %v787, 0
        %v841 = vsel %vm801, %v791, 0
        %843 = vmatpush.bf16.msra.mxu0 0
        %844 = vmatpush.bf16.msra.mxu0 0
        %845 = vmatpush.bf16.msra.mxu0 0
        %846 = vmatpush.bf16.msra.mxu0 0
        %847 = vmatpush.bf16.msra.mxu0 0
        %848 = vmatpush.bf16.msra.mxu0 0
        %849 = vmatpush.bf16.msra.mxu0 0
        %850 = vmatpush.bf16.msra.mxu0 %v841
        %851 = vmatmul.bf16.gmra.mxu0 %v838
        %v852 = vpop.f32.mrf.mxu0
        %v853 = vadd.f32 0.0, %v852
        %v854 = vpop.f32.mrf.mxu0
        %855 = vdwg.mxu0
        %v857 = vsel %vm797, %v788, 0
        %v860 = vsel %vm801, %v792, 0
        %862 = vmatpush.bf16.msra.mxu0 0
        %863 = vmatpush.bf16.msra.mxu0 0
        %864 = vmatpush.bf16.msra.mxu0 0
        %865 = vmatpush.bf16.msra.mxu0 0
        %866 = vmatpush.bf16.msra.mxu0 0
        %867 = vmatpush.bf16.msra.mxu0 0
        %868 = vmatpush.bf16.msra.mxu0 0
        %869 = vmatpush.bf16.msra.mxu0 %v860
        %870 = vmatmul.bf16.gmra.mxu0 %v857
        %v871 = vpop.f32.mrf.mxu0
        %v872 = vadd.f32 0.0, %v871
        %v873 = vpop.f32.mrf.mxu0
        %874 = vdwg.mxu0
        %v875 = vsel %vm797, %v815, -inf
        %876 = vmax.xlane.f32.xlu0 %v875
        %v877 = vpop.xlane.xlu0 %876
        %v878 = vsel %vm797, %v834, -inf
        %879 = vmax.xlane.f32.xlu0 %v878
        %v880 = vpop.xlane.xlu0 %879
        %v881 = vsel %vm797, %v853, -inf
        %882 = vmax.xlane.f32.xlu0 %v881
        %v883 = vpop.xlane.xlu0 %882
        %v884 = vsel %vm797, %v872, -inf
        %885 = vmax.xlane.f32.xlu0 %v884
        %v886 = vpop.xlane.xlu0 %885
        %v887 = vsub.f32 -inf, %v877
        %v888 = vsub.f32 -inf, %v880
        %v889 = vsub.f32 -inf, %v883
        %v890 = vsub.f32 -inf, %v886
        %v891 = vmul.f32 %v887, 1.442695
        %v892 = vpow.pop %v891
        %v893 = vmul.f32 %v888, 1.442695
        %v894 = vpow.pop %v893
        %v895 = vmul.f32 %v889, 1.442695
        %v896 = vpow.pop %v895
        %v897 = vmul.f32 %v890, 1.442695
        %v898 = vpow.pop %v897
        %v899 = vsub.f32 %v815, %v877
        %v900 = vsub.f32 %v834, %v880
        %v901 = vsub.f32 %v853, %v883
        %v902 = vsub.f32 %v872, %v886
        %v903 = vmul.f32 %v899, 1.442695
        %v904 = vpow.pop %v903
        %v905 = vmul.f32 %v900, 1.442695
        %v906 = vpow.pop %v905
        %v907 = vmul.f32 %v901, 1.442695
        %v908 = vpow.pop %v907
        %v909 = vmul.f32 %v902, 1.442695
        %v910 = vpow.pop %v909
        %v911 = vmul.f32 %v892, 0.0
        %v912 = vmul.f32 %v894, 0.0
        %v913 = vmul.f32 %v896, 0.0
        %v914 = vmul.f32 %v898, 0.0
        %v915 = vsel %vm797, %v904, 0.0
        %916 = vadd.xlane.f32.xlu0 %v915
        %v917 = vpop.xlane.xlu0 %916
        %v918 = vsel %vm797, %v906, 0.0
        %919 = vadd.xlane.f32.xlu0 %v918
        %v920 = vpop.xlane.xlu0 %919
        %v921 = vsel %vm797, %v908, 0.0
        %922 = vadd.xlane.f32.xlu0 %v921
        %v923 = vpop.xlane.xlu0 %922
        %v924 = vsel %vm797, %v910, 0.0
        %925 = vadd.xlane.f32.xlu0 %v924
        %v926 = vpop.xlane.xlu0 %925
        %v927 = vadd.f32 %v911, %v917
        %v928 = vadd.f32 %v912, %v920
        %v929 = vadd.f32 %v913, %v923
        %v930 = vadd.f32 %v914, %v926
        %v931 = vpack.c.bf16 %v904, %v904
        %v932 = vpack.c.bf16 %v906, %v906
        %v933 = vpack.c.bf16 %v908, %v908
        %v934 = vpack.c.bf16 %v910, %v910
        %v936 = vsel %vm797, %v931, 0
        %v939 = vsel %vm801, %v793, 0
        %941 = vmatpush.bf16.msra.mxu0 0
        %942 = vmatpush.bf16.msra.mxu0 0
        %943 = vmatpush.bf16.msra.mxu0 0
        %944 = vmatpush.bf16.msra.mxu0 0
        %945 = vmatpush.bf16.msra.mxu0 0
        %946 = vmatpush.bf16.msra.mxu0 0
        %947 = vmatpush.bf16.msra.mxu0 0
        %948 = vmatpush.bf16.msra.mxu0 %v939
        %949 = vmatmul.bf16.gmra.mxu0 %v936
        %v950 = vpop.f32.mrf.mxu0
        %v951 = vadd.f32 0.0, %v950
        %v952 = vpop.f32.mrf.mxu0
        %953 = vdwg.mxu0
        %v955 = vsel %vm797, %v932, 0
        %v958 = vsel %vm801, %v794, 0
        %960 = vmatpush.bf16.msra.mxu0 0
        %961 = vmatpush.bf16.msra.mxu0 0
        %962 = vmatpush.bf16.msra.mxu0 0
        %963 = vmatpush.bf16.msra.mxu0 0
        %964 = vmatpush.bf16.msra.mxu0 0
        %965 = vmatpush.bf16.msra.mxu0 0
        %966 = vmatpush.bf16.msra.mxu0 0
        %967 = vmatpush.bf16.msra.mxu0 %v958
        %968 = vmatmul.bf16.gmra.mxu0 %v955
        %v969 = vpop.f32.mrf.mxu0
        %v970 = vadd.f32 0.0, %v969
        %v971 = vpop.f32.mrf.mxu0
        %972 = vdwg.mxu0
        %v974 = vsel %vm797, %v933, 0
        %v977 = vsel %vm801, %v795, 0
        %979 = vmatpush.bf16.msra.mxu0 0
        %980 = vmatpush.bf16.msra.mxu0 0
        %981 = vmatpush.bf16.msra.mxu0 0
        %982 = vmatpush.bf16.msra.mxu0 0
        %983 = vmatpush.bf16.msra.mxu0 0
        %984 = vmatpush.bf16.msra.mxu0 0
        %985 = vmatpush.bf16.msra.mxu0 0
        %986 = vmatpush.bf16.msra.mxu0 %v977
        %987 = vmatmul.bf16.gmra.mxu0 %v974
        %v988 = vpop.f32.mrf.mxu0
        %v989 = vadd.f32 0.0, %v988
        %v990 = vpop.f32.mrf.mxu0
        %991 = vdwg.mxu0
        %v993 = vsel %vm797, %v934, 0
        %v996 = vsel %vm801, %v796, 0
        %998 = vmatpush.bf16.msra.mxu0 0
        %999 = vmatpush.bf16.msra.mxu0 0
        %1000 = vmatpush.bf16.msra.mxu0 0
        %1001 = vmatpush.bf16.msra.mxu0 0
        %1002 = vmatpush.bf16.msra.mxu0 0
        %1003 = vmatpush.bf16.msra.mxu0 0
        %1004 = vmatpush.bf16.msra.mxu0 0
        %1005 = vmatpush.bf16.msra.mxu0 %v996
        %1006 = vmatmul.bf16.gmra.mxu0 %v993
        %v1007 = vpop.f32.mrf.mxu0
        %v1008 = vadd.f32 0.0, %v1007
        %v1009 = vpop.f32.mrf.mxu0
        %1010 = vdwg.mxu0
        %v1011 = vadd.f32 %v911, %v951
        %v1012 = vadd.f32 %v912, %v970
        %v1013 = vadd.f32 %v913, %v989
        %v1014 = vadd.f32 %v914, %v1008
        %v1015 = vrcp.pop %v927
        %v1016 = vrcp.pop %v928
        %v1017 = vrcp.pop %v929
        %v1018 = vrcp.pop %v930
        %v1019 = vmul.f32 %v1011, %v1015
        %v1020 = vmul.f32 %v1012, %v1016
        %v1021 = vmul.f32 %v1013, %v1017
        %v1022 = vmul.f32 %v1014, %v1018
        %v1023 = vrot.slane %v1021, 4
        %v1024 = vsel %vm675, %v1023, %v1019
        %v1025 = vrot.slane %v1019, 4
        %v1026 = vsel %vm675, %v1021, %v1025
        %v1028 = vunpack.c.l.s4 1983009808
        %v1029 = vunpack.c.0.s8 %v1028
        %v1030 = vperm.slane %v1024, %v1029
        %v1032 = vunpack.c.l.s4 1983009808
        %v1033 = vunpack.c.0.s8 %v1032
        %v1034 = vperm.slane %v1026, %v1033
        %v1035 = vrot.slane %v1022, 4
        %v1036 = vsel %vm675, %v1035, %v1020
        %v1037 = vrot.slane %v1020, 4
        %v1038 = vsel %vm675, %v1022, %v1037
        %v1040 = vunpack.c.l.s4 1983009808
        %v1041 = vunpack.c.0.s8 %v1040
        %v1042 = vperm.slane %v1036, %v1041
        %v1044 = vunpack.c.l.s4 1983009808
        %v1045 = vunpack.c.0.s8 %v1044
        %v1046 = vperm.slane %v1038, %v1045
        %v1047 = vrot.slane %v1042, 4
        %v1048 = vsel %vm675, %v1047, %v1030
        %v1049 = vrot.slane %v1030, 4
        %v1050 = vsel %vm675, %v1042, %v1049
        %v1052 = vunpack.c.l.s4 1934713408
        %v1053 = vunpack.c.0.s8 %v1052
        %v1054 = vperm.slane %v1048, %v1053
        %v1056 = vunpack.c.l.s4 1934713408
        %v1057 = vunpack.c.0.s8 %v1056
        %v1058 = vperm.slane %v1050, %v1057
        %v1059 = vrot.slane %v1046, 4
        %v1060 = vsel %vm675, %v1059, %v1034
        %v1061 = vrot.slane %v1034, 4
        %v1062 = vsel %vm675, %v1046, %v1061
        %v1064 = vunpack.c.l.s4 1934713408
        %v1065 = vunpack.c.0.s8 %v1064
        %v1066 = vperm.slane %v1060, %v1065
        %v1068 = vunpack.c.l.s4 1934713408
        %v1069 = vunpack.c.0.s8 %v1068
        %v1070 = vperm.slane %v1062, %v1069
        %v1071 = vrot.slane %v1054, 4
        %v1072 = vsel %vm675, 0.0, %v1071
        %v1073 = vrot.slane %v1058, 4
        %v1074 = vsel %vm675, 0.0, %v1073
        %v1075 = vrot.slane %v1066, 4
        %v1076 = vsel %vm675, 0.0, %v1075
        %v1077 = vrot.slane %v1070, 4
        %v1078 = vsel %vm675, 0.0, %v1077
        %v1079 = vsel %vm675, %v1073, %v1054
        %v1081 = vunpack.c.l.s4 1983009808
        %v1082 = vunpack.c.0.s8 %v1081
        %v1083 = vperm.slane %v1079, %v1082
        %v1084 = vrot.slane %v1074, 4
        %v1085 = vsel %vm675, %v1084, %v1072
        %v1087 = vunpack.c.l.s4 1983009808
        %v1088 = vunpack.c.0.s8 %v1087
        %v1089 = vperm.slane %v1085, %v1088
        %v1090 = vsel %vm675, %v1077, %v1066
        %v1092 = vunpack.c.l.s4 1983009808
        %v1093 = vunpack.c.0.s8 %v1092
        %v1094 = vperm.slane %v1090, %v1093
        %v1095 = vrot.slane %v1078, 4
        %v1096 = vsel %vm675, %v1095, %v1076
        %v1098 = vunpack.c.l.s4 1983009808
        %v1099 = vunpack.c.0.s8 %v1098
        %v1100 = vperm.slane %v1096, %v1099
        %v1101 = vrot.slane %v1089, 4
        %v1102 = vsel %vm675, %v1101, %v1083
        %v1103 = vrot.slane %v1083, 4
        %v1104 = vsel %vm675, %v1089, %v1103
        %v1106 = vunpack.c.l.s4 1934713408
        %v1107 = vunpack.c.0.s8 %v1106
        %v1108 = vperm.slane %v1102, %v1107
        %v1110 = vunpack.c.l.s4 1934713408
        %v1111 = vunpack.c.0.s8 %v1110
        %v1112 = vperm.slane %v1104, %v1111
        %v1113 = vrot.slane %v1100, 4
        %v1114 = vsel %vm675, %v1113, %v1094
        %v1115 = vrot.slane %v1094, 4
        %v1116 = vsel %vm675, %v1100, %v1115
        %v1118 = vunpack.c.l.s4 1934713408
        %v1119 = vunpack.c.0.s8 %v1118
        %v1120 = vperm.slane %v1114, %v1119
        %v1122 = vunpack.c.l.s4 1934713408
        %v1123 = vunpack.c.0.s8 %v1122
        %v1124 = vperm.slane %v1116, %v1123
        %v1125 = vrot.slane %v1120, 4
        %v1126 = vsel %vm675, %v1125, %v1108
        %v1127 = vrot.slane %v1108, 4
        %v1128 = vsel %vm675, %v1120, %v1127
        %v1129 = vrot.slane %v1124, 4
        %v1130 = vsel %vm675, %v1129, %v1112
        %v1131 = vrot.slane %v1112, 4
        %v1132 = vsel %vm675, %v1124, %v1131
        %1134 = vrot.lane.b32.xlu0 %v1128, 8
        %v1135 = vpop.permute.xlu0 %1134
        %1138 = vrot.lane.b32.xlu0 %v1130, 16
        %v1139 = vpop.permute.xlu0 %1138
        %1142 = vrot.lane.b32.xlu0 %v1132, 24
        %v1143 = vpop.permute.xlu0 %1142
        %v1145 = vsel %vm797, %v1126, %v1135
        %vm1146 = vcmask 130048
        %v1147 = vsel %vm1146, %v1145, %v1139
        %vm1148 = vcmask 195584
        %v1149 = vsel %vm1148, %v1147, %v1143
        %v1150 = vpack.c.bf16 %v1149, %v1149
        %v1151 = vld [vmem:[#allocation12] sm:$0xf]
        %v1152 = vld [vmem:[#allocation12 + $0x4] sm:$0xf]
        %v1153 = vld [vmem:[#allocation12 + $0x8] sm:$0xf]
        %v1154 = vld [vmem:[#allocation12 + $0xc] sm:$0xf]
        %v1159 = vunpack.c.l.b16 %v1151
        %v1160 = vunpack.c.l.b16 %v1152
        %v1161 = vunpack.c.l.b16 %v1153
        %v1162 = vunpack.c.l.b16 %v1154
        %v1163 = vpack.c.b16 %v1160, %v1159
        %v1164 = vpack.c.b16 %v1162, %v1161
        %v1168 = vsel %vm647, %v1150, 0
        %1170 = vmatpush.bf16.msra.mxu0 0
        %1171 = vmatpush.bf16.msra.mxu0 0
        %1172 = vmatpush.bf16.msra.mxu0 0
        %1173 = vmatpush.bf16.msra.mxu0 0
        %1174 = vmatpush.bf16.msra.mxu0 0
        %1175 = vmatpush.bf16.msra.mxu0 0
        %1176 = vmatpush.bf16.msra.mxu0 %v1164
        %1177 = vmatpush.bf16.msra.mxu0 %v1163
        %1178 = vmatmul.bf16.gmra.mxu0 %v1168
        %v1179 = vpop.f32.mrf.mxu0
        %v1180 = vadd.f32 0.0, %v1179
        %v1181 = vpop.f32.mrf.mxu0
        %1182 = vdwg.mxu0
        %v1183 = vadd.f32 %v629, %v1180
        %v1184 = vsel %vm647, %v1183, 0.0
        %1185 = vadd.xlane.f32.xlu0 %v1184
        %v1186 = vpop.xlane.xlu0 %1185
        %v1187 = vrcp.pop 32.0
        %v1188 = vmul.f32 32.0, %v1187
        %v1189 = vsub.f32 1.0, %v1188
        %v1190 = vmul.f32 %v1187, %v1189
        %v1191 = vadd.f32 %v1187, %v1190
        %vm1192 = vweird.f32 %v1187
        %v1193 = vsel %vm1192, %v1187, %v1191
        %v1194 = vmul.f32 %v1186, %v1193
        %v1195 = vsub.f32 %v1183, %v1194
        %v1196 = vmul.f32 %v1195, %v1195
        %v1197 = vsel %vm647, %v1196, 0.0
        %1198 = vadd.xlane.f32.xlu0 %v1197
        %v1199 = vpop.xlane.xlu0 %1198
        %v1200 = vmul.f32 %v1199, %v1193
        %v1201 = vadd.f32 %v1200, 1e-05
        %v1202 = vrsqrt.pop %v1201
        %v1203 = vmul.f32 %v1202, %v1201
        %v1204 = vmul.f32 %v1203, %v1202
        %v1205 = vmul.f32 0.5, %v1204
        %v1206 = vsub.f32 1.5, %v1205
        %v1207 = vmul.f32 %v1202, %v1206
        %vm1208 = vweird.f32 %v1201
        %vm1209 = vweird.f32 %v1202
        %vm1210 = vmor %vm1208, %vm1209
        %v1211 = vsel %vm1210, %v1202, %v1207
        %v1212 = vmul.f32 %v1195, %v1211
        %v1213 = vld [vmem:[%s5] sm:$0x1]
        %v1215 = vperm.slane %v1213, 0
        %v1217 = vmul.f32 %v1212, %v1215
        %v1218 = vld [vmem:[%s6] sm:$0x1]
        %v1220 = vperm.slane %v1218, 0
        %v1222 = vadd.f32 %v1217, %v1220
        %1223 = vst.msk [vmem:[%s375] sm:$0xff] %vm647, %v1222
        %s1224 = sand.u32 %s200, 1
        %s1225 = scalar_lea.sflag [#allocation6], %s1224
        %s1226 = sand.u32 %s200, 1
        %s1227 = smul.addr %s1226, 8
        %s1228 = scalar_lea.vmem [#allocation13], %s1227
        // Predicated region
        $region73: #{tpu_custom_call.1} parent=47 // pred_check
          %p1229 = pneg %p210
        $region74: #{tpu_custom_call.1} parent=47 // pred_check_branch
          %1231 = sbr.rel (%p1229) target = $region76
        $region75: #{tpu_custom_call.1} parent=47 // pred_region
          %1233 = vsyncadd %s1225, 0
          %s1234 = sadd.s32 %s31, %s30
          %s1235 = smul.addr %s1234, 8
          %s1236 = scalar_lea.hbm %s7, %s1235
          %s1238 = sshll.u32 %s1228, 4
          %s1239 = int_to_ptr.vmem [resolvable:$true] %s1238
          %s1240 = sshll.u32 %s1236, 4
          %s1241 = int_to_ptr.hbm [resolvable:$true] %s1240
          %1243 = dma.vmem_to_hbm [thread:$0]  %s1239, 128, %s1241, %s1225
        $region76: #{tpu_custom_call.1} parent=47 // pred_fallthru
          _
      $region48: #{tpu_custom_call.1} parent=5 // pred_fallthru
        _
      %p1244 = scmp.le.s32.totalorder 2, %s21
      // Predicated region
      $region77: #{tpu_custom_call.1} parent=5 // pred_check
        %p1245 = pneg %p1244
      $region78: #{tpu_custom_call.1} parent=5 // pred_check_branch
        %1247 = sbr.rel (%p1245) target = $region80
      $region79: #{tpu_custom_call.1} parent=5 // pred_region
        %s1248 = ssub.s32 %s21, 2
        // Predicated region
        $region81: #{tpu_custom_call.1} parent=79 // pred_check
          %p1249 = pneg %p216
        $region82: #{tpu_custom_call.1} parent=79 // pred_check_branch
          %1251 = sbr.rel (%p1249) target = $region84
        $region83: #{tpu_custom_call.1} parent=79 // pred_region
          %s1252 = sand.u32 %s201, 1
          %s1253 = scalar_lea.sflag [#allocation6], %s1252
          %s1254 = sand.u32 %s201, 1
          %s1255 = smul.addr %s1254, 8
          %s1256 = scalar_lea.vmem [#allocation13], %s1255
          %1258 = dma.done %s1253, 128
        $region84: #{tpu_custom_call.1} parent=79 // pred_fallthru
          _
      $region80: #{tpu_custom_call.1} parent=5 // pred_fallthru
        _
    $region6: #{tpu_custom_call.1} parent=1 // loop_footer
      %s25 = sadd.s32 1, %s21
    $region7: #{tpu_custom_call.1} parent=1 // loop_footer_branch
      %20 = sbr.rel target = $region3
    $region8: #{tpu_custom_call.1} parent=1 // loop_exit
      _
    %1259 = vsyncpa [#allocation5], 1
    %s1260 = scalar_lea.sflag [#allocation5], 1
    %1261 = vsyncpa %s1260, 1
    %1262 = vsyncpa [#allocation8], 1
    %1263 = vsyncpa [#allocation11], 1
    %1264 = vsyncpa [#allocation6], 1
    %s1265 = scalar_lea.sflag [#allocation6], 1
    %1266 = vsyncpa %s1265, 1

</llo_original>
